<compile_context>
chip_gen: v7x
topology: tpu7x:2x2x1
jax: 0.10.0
libtpu: 0.0.40
codegen_flags: <defaults>
</compile_context>

<pallas_src>
import math
import functools

import jax
import jax.numpy as jnp
from jax.experimental import pallas as pl
from jax.experimental.pallas import tpu as pltpu


# ----------------------------- small helpers -----------------------------

def _round_up(x, m):
    return ((x + m - 1) // m) * m


def _layer_norm(x, g, b, eps):
    mu = jnp.mean(x, axis=-1, keepdims=True)
    xc = x - mu
    var = jnp.mean(xc * xc, axis=-1, keepdims=True)
    inv = jax.lax.rsqrt(var + eps)
    return xc * inv * g + b


def _gelu_exact(x):
    # torch nn.functional.gelu default = exact erf formulation
    return 0.5 * x * (1.0 + jax.lax.erf(x / math.sqrt(2.0)))


# ------------------------------- fused kernel ---------------------------------

def bert_fused_kernel(
        # batched / layer-invariant inputs
        emb_ref, mask_ref, embln_ref,
        # per-layer stacked inputs (selected by index_map over the layer axis)
        wqkv_r, bqkv_r, wo_r, wi_r, bi_r, w2_r, lns_r,
        # head parameters (layer-invariant)
        hww_r, hsm_r, dw_r, db_r, nw_r, nb_r,
        # outputs
        seq_ref, pred_ref, slab_ref,
        # scratch
        hid_ref,
        *, Bt, S, H, NH, HD, Vpad, P, eps):
    l = pl.program_id(1)
    n_layers = pl.num_programs(1)
    bf16 = jnp.bfloat16

    # ---- embeddings LayerNorm fused into the first layer step of each batch tile ----
    @pl.when(l == 0)
    def _():
        hid_ref[...] = _layer_norm(emb_ref[...], embln_ref[0:1, :], embln_ref[1:2, :],
                                   eps)

    x = hid_ref[...]                                   # (Bt, S, H) f32, VMEM carry
    x2 = x.reshape(Bt * S, H)

    # ---- fused QKV projection: one (H, 3H) bf16 matmul, f32 accumulate ----
    qkv = jnp.dot(x2.astype(bf16), wqkv_r[...],
                  preferred_element_type=jnp.float32) + bqkv_r[...]
    q3 = qkv[:, 0 * H:1 * H].reshape(Bt, S, H)
    k3 = qkv[:, 1 * H:2 * H].reshape(Bt, S, H)
    v3 = qkv[:, 2 * H:3 * H].reshape(Bt, S, H)

    # fold heads into the batch axis -> single pair of batched einsums for all heads
    qh = jnp.concatenate([q3[:, :, h * HD:(h + 1) * HD] for h in range(NH)],
                         axis=0).astype(bf16)
    kh = jnp.concatenate([k3[:, :, h * HD:(h + 1) * HD] for h in range(NH)],
                         axis=0).astype(bf16)
    vh = jnp.concatenate([v3[:, :, h * HD:(h + 1) * HD] for h in range(NH)],
                         axis=0).astype(bf16)

    scale = 1.0 / math.sqrt(HD)
    s = jnp.einsum('bqd,bkd->bqk', qh, kh,
                   preferred_element_type=jnp.float32) * scale
    # additive mask: broadcast over heads/rows via a leading reshape (no NH-way concat)
    s = (s.reshape(NH, Bt, S, S) + mask_ref[...][None]).reshape(NH * Bt, S, S)

    # manual softmax (f32); exp + approximate reciprocal use the EUP slot
    m = jnp.max(s, axis=-1, keepdims=True)
    e = jnp.exp(s - m)
    p = e * pl.reciprocal(jnp.sum(e, axis=-1, keepdims=True), approx=True)

    ctx = jnp.einsum('bqk,bkd->bqd', p.astype(bf16), vh,
                     preferred_element_type=jnp.float32)            # (NH*Bt, S, HD)

    # reassemble heads with ONE lane-axis concat (no scratch, no partial stores),
    # then a single K=H output projection
    ctx2 = jnp.concatenate(
        [ctx[h * Bt:(h + 1) * Bt].reshape(Bt * S, HD) for h in range(NH)], axis=-1)
    attn = (jnp.dot(ctx2.astype(bf16), wo_r[...],
                    preferred_element_type=jnp.float32)
            + lns_r[0:1, :]).reshape(Bt, S, H)

    h1 = _layer_norm(attn + x, lns_r[1:2, :], lns_r[2:3, :], eps)

    # ---- feed-forward (bf16 matmuls, f32 GELU / LayerNorm) ----
    inter = _gelu_exact(
        jnp.dot(h1.reshape(Bt * S, H).astype(bf16), wi_r[...],
                preferred_element_type=jnp.float32) + bi_r[...])
    ffn = (jnp.dot(inter.astype(bf16), w2_r[...],
                   preferred_element_type=jnp.float32)
           + lns_r[3:4, :]).reshape(Bt, S, H)
    out = _layer_norm(ffn + h1, lns_r[4:5, :], lns_r[5:6, :], eps)

    hid_ref[...] = out                                 # carry to next layer (VMEM)

    # ---- pooler + pretraining heads fused into the last layer step ----
    @pl.when(l == n_layers - 1)
    def _():
        seq_ref[...] = out

        # pooler: first token -> dense -> tanh
        first = out[:, 0:1, :].reshape(Bt, H)
        pooled = jnp.tanh(
            jnp.dot(first.astype(bf16), hww_r[0],
                    preferred_element_type=jnp.float32) + hsm_r[0:1, :])

        # NSP head
        nsp = jnp.dot(pooled, nw_r[...],
                      preferred_element_type=jnp.float32) + nb_r[...]

        # pack pooled + NSP into one lane-dense slab (width P, multiple of 128)
        parts = [pooled, nsp]
        if P > H + 2:
            parts.append(jnp.zeros((Bt, P - H - 2), jnp.float32))
        slab_ref[...] = jnp.concatenate(parts, axis=-1).reshape(Bt, 1, P)

        # MLM head: transform (dense + gelu + LayerNorm) then tied decoder + bias
        t = jnp.dot(out.reshape(Bt * S, H).astype(bf16), hww_r[1],
                    preferred_element_type=jnp.float32) + hsm_r[1:2, :]
        t = _layer_norm(_gelu_exact(t), hsm_r[2:3, :], hsm_r[3:4, :], eps)
        logits = jnp.dot(t.astype(bf16), dw_r[...],
                         preferred_element_type=jnp.float32) + db_r[...]
        pred_ref[...] = logits.reshape(Bt, S, Vpad)


# ------------------------------ BlockSpec helpers ------------------------------

def _make_spec(arr, kind, Bt):
    """Returns (BlockSpec, per-grid-step block bytes) for a kernel operand."""
    shp = tuple(arr.shape)
    itemsize = jnp.dtype(arr.dtype).itemsize
    nd = len(shp)
    if kind == 'layer':          # stacked over layers: leading dim = layer index
        spec = pl.BlockSpec((None,) + shp[1:],
                            lambda b, l, nd=nd: (l,) + (0,) * (nd - 1))
        nbytes = math.prod(shp[1:]) * itemsize
    elif kind == 'batched':      # blocked over the batch grid axis
        spec = pl.BlockSpec((Bt,) + shp[1:],
                            lambda b, l, nd=nd: (b,) + (0,) * (nd - 1))
        nbytes = Bt * math.prod(shp[1:]) * itemsize
    else:                        # 'const' -> full array, DMA'd once
        spec = pl.BlockSpec(shp, lambda b, l, nd=nd: (0,) * nd)
        nbytes = math.prod(shp) * itemsize
    return spec, nbytes


# ------------------------------ parameter setup --------------------------------

def init_params(key, *, vocab, max_pos, type_vocab, H, I, L):
    keys = iter(jax.random.split(key, 128))

    def w(shape):
        return jax.random.normal(next(keys), shape, jnp.float32) * 0.02

    params = {}
    params['word'] = w((vocab, H)).at[0].set(0.0)       # padding_idx=0
    params['pos'] = w((max_pos, H))
    params['tok'] = w((type_vocab, H))
    params['emb_ln_g'] = jnp.ones((1, H), jnp.float32)
    params['emb_ln_b'] = jnp.zeros((1, H), jnp.float32)

    def stack_w(shape):
        return jnp.stack([w(shape) for _ in range(L)], axis=0)

    params['wq'] = stack_w((H, H)); params['bq'] = jnp.zeros((L, 1, H), jnp.float32)
    params['wk'] = stack_w((H, H)); params['bk'] = jnp.zeros((L, 1, H), jnp.float32)
    params['wv'] = stack_w((H, H)); params['bv'] = jnp.zeros((L, 1, H), jnp.float32)
    params['wo'] = stack_w((H, H)); params['bo'] = jnp.zeros((L, 1, H), jnp.float32)
    params['ln1_g'] = jnp.ones((L, 1, H), jnp.float32)
    params['ln1_b'] = jnp.zeros((L, 1, H), jnp.float32)
    params['wi'] = stack_w((H, I)); params['bi'] = jnp.zeros((L, 1, I), jnp.float32)
    params['w2'] = stack_w((I, H)); params['b2'] = jnp.zeros((L, 1, H), jnp.float32)
    params['ln2_g'] = jnp.ones((L, 1, H), jnp.float32)
    params['ln2_b'] = jnp.zeros((L, 1, H), jnp.float32)

    params['pool_w'] = w((H, H)); params['pool_b'] = jnp.zeros((1, H), jnp.float32)
    params['mlm_w'] = w((H, H)); params['mlm_b'] = jnp.zeros((1, H), jnp.float32)
    params['mlm_ln_g'] = jnp.ones((1, H), jnp.float32)
    params['mlm_ln_b'] = jnp.zeros((1, H), jnp.float32)
    params['dec_b'] = jnp.zeros((1, vocab), jnp.float32)
    params['nsp_w'] = w((H, 2)); params['nsp_b'] = jnp.zeros((1, 2), jnp.float32)
    return params


def pack_params(params, *, V, H):
    """Fuse/stack/cast parameters once (host side) into kernel-ready arrays."""
    b16 = jnp.bfloat16
    Vpad = _round_up(V, 128)

    wqkv = jnp.concatenate([params['wq'], params['wk'], params['wv']], axis=-1).astype(b16)
    bqkv = jnp.concatenate([params['bq'], params['bk'], params['bv']], axis=-1)
    # consolidated per-layer small params: rows = [bo, ln1_g, ln1_b, b2, ln2_g, ln2_b]
    lns = jnp.concatenate([params['bo'], params['ln1_g'], params['ln1_b'],
                           params['b2'], params['ln2_g'], params['ln2_b']], axis=1)
    embln = jnp.concatenate([params['emb_ln_g'], params['emb_ln_b']], axis=0)   # (2,H)
    head_wHH = jnp.stack([params['pool_w'], params['mlm_w']], axis=0).astype(b16)
    head_small = jnp.concatenate([params['pool_b'], params['mlm_b'],
                                  params['mlm_ln_g'], params['mlm_ln_b']], axis=0)
    # tied decoder (word.T), padded to a lane-dense vocab; padded logits are 0 and
    # sliced away in the wrapper
    dec_wt = jnp.zeros((H, Vpad), b16).at[:, :V].set(params['word'].T.astype(b16))
    dec_b = jnp.zeros((1, Vpad), jnp.float32).at[:, :V].set(params['dec_b'])

    return dict(word=params['word'], pos=params['pos'], tok=params['tok'],
                embln=embln, wqkv=wqkv, bqkv=bqkv,
                wo=params['wo'].astype(b16), wi=params['wi'].astype(b16),
                bi=params['bi'], w2=params['w2'].astype(b16), lns=lns,
                head_wHH=head_wHH, head_small=head_small,
                dec_wt=dec_wt, dec_b=dec_b,
                nsp_w=params['nsp_w'], nsp_b=params['nsp_b'])


# ---------------------------------- forward ------------------------------------

def bert_for_pretraining_forward(packed, input_ids, attention_mask, token_type_ids,
                                 *, B, S, H, NH, HD, L, V, eps, Bt=1):
    assert B % Bt == 0
    Vpad = packed['dec_wt'].shape[1]
    P = _round_up(H + 2, 128)          # pooled + NSP packed into one lane-dense slab

    # extended attention mask: (1 - mask) * -10000, shaped (B, 1, S) additive bias
    ext_mask = ((1.0 - attention_mask.astype(jnp.float32)) * -10000.0)[:, None, :]

    # embedding gathers stay in plain JAX (data-dependent gather = glue)
    position_ids = jnp.arange(S, dtype=jnp.int32)
    emb_sum = (jnp.take(packed['word'], input_ids, axis=0)
               + jnp.take(packed['pos'], position_ids, axis=0)[None]
               + jnp.take(packed['tok'], token_type_ids, axis=0))

    entries = [
        (emb_sum, 'batched'), (ext_mask, 'batched'), (packed['embln'], 'const'),
        (packed['wqkv'], 'layer'), (packed['bqkv'], 'layer'),
        (packed['wo'], 'layer'), (packed['wi'], 'layer'), (packed['bi'], 'layer'),
        (packed['w2'], 'layer'), (packed['lns'], 'layer'),
        (packed['head_wHH'], 'const'), (packed['head_small'], 'const'),
        (packed['dec_wt'], 'const'), (packed['dec_b'], 'const'),
        (packed['nsp_w'], 'const'), (packed['nsp_b'], 'const'),
    ]
    in_specs, in_bytes = [], 0
    for arr, kind in entries:
        spec, nb = _make_spec(arr, kind, Bt)
        in_specs.append(spec)
        in_bytes += nb

    out_shapes = (jax.ShapeDtypeStruct((B, S, H), jnp.float32),     # sequence_output
                  jax.ShapeDtypeStruct((B, S, Vpad), jnp.float32),  # padded MLM logits
                  jax.ShapeDtypeStruct((B, 1, P), jnp.float32))     # pooled+NSP slab
    out_specs, out_bytes = [], 0
    for s_ in out_shapes:
        spec, nb = _make_spec(s_, 'batched', Bt)
        out_specs.append(spec)
        out_bytes += nb

    scratch_bytes = Bt * S * H * 4
    # explicit scoped-VMEM budget: double-buffered blocks + carry + margin
    vmem_limit = min(2 * (in_bytes + out_bytes) + scratch_bytes + (16 << 20), 64 << 20)

    grid_spec = pltpu.PrefetchScalarGridSpec(
        num_scalar_prefetch=0,
        grid=(B // Bt, L),                              # (batch tiles, layers)
        in_specs=in_specs,
        out_specs=out_specs,
        scratch_shapes=[pltpu.VMEM((Bt, S, H), jnp.float32)])   # hidden-state carry

    seq_out, pred_pad, slab = pl.pallas_call(
        functools.partial(bert_fused_kernel, Bt=Bt, S=S, H=H, NH=NH, HD=HD,
                          Vpad=Vpad, P=P, eps=eps),
        grid_spec=grid_spec,
        out_shape=out_shapes,
        compiler_params=pltpu.CompilerParams(
            dimension_semantics=("parallel", "arbitrary"),   # batch parallel, layers sequential
            vmem_limit_bytes=int(vmem_limit)),
    )(*[a for a, _ in entries])

    pred = pred_pad[:, :, :V]
    pooled = slab[:, 0, :H]
    nsp = slab[:, 0, H:H + 2]
    # TODO(synk): masked-LM / next-sentence CrossEntropyLoss (labels path) not implemented;
    #             this matches the labels=None forward of BertForPreTraining.
    return pred, nsp, seq_out, pooled


# ------------------------------------ main --------------------------------------

if __name__ == "__main__":
    # hp: vocab_size=50, hidden_size=32, num_attention_heads=4, intermediate=64,
    #     num_hidden_layers=2, max_position_embeddings=16, type_vocab_size=2,
    #     layer_norm_eps=1e-12, do_random_next=True, eval-mode dropout.
    B, S, H, NH, L = 2, 8, 32, 4, 2
    HD = H // NH
    I = 64
    VOCAB, MAX_POS, TYPE_VOCAB = 50, 16, 2
    EPS = 1e-12

    root = jax.random.PRNGKey(0)
    k_ids, k_params = jax.random.split(root)

    input_ids = jax.random.randint(k_ids, (B, S), 1, VOCAB, dtype=jnp.int32)
    token_type_ids = jnp.zeros((B, S), jnp.int32)
    attention_mask = jnp.ones((B, S), jnp.int32).at[1, -2:].set(0)   # exercise the mask

    params = init_params(k_params, vocab=VOCAB, max_pos=MAX_POS,
                         type_vocab=TYPE_VOCAB, H=H, I=I, L=L)
    packed = pack_params(params, V=VOCAB, H=H)

    pred, nsp, seq_out, pooled = bert_for_pretraining_forward(
        packed, input_ids, attention_mask, token_type_ids,
        B=B, S=S, H=H, NH=NH, HD=HD, L=L, V=VOCAB, eps=EPS, Bt=1)

    jax.block_until_ready((pred, nsp, seq_out, pooled))

    assert pred.shape == (B, S, VOCAB)
    assert nsp.shape == (B, 2)
    assert seq_out.shape == (B, S, H)
    assert pooled.shape == (B, H)
    for t in (pred, nsp, seq_out, pooled):
        assert bool(jnp.all(jnp.isfinite(t)))
    print("KERNEL_OK")
</pallas_src>

<mosaic_0001>
module attributes {stable_mosaic.version = 11 : i64} {
  func.func @bert_fused_kernel(%arg0: i32, %arg1: i32, %arg2: memref<1x8x32xf32, #tpu.memory_space<vmem>>, %arg3: memref<1x1x8xf32, #tpu.memory_space<vmem>>, %arg4: memref<2x32xf32, #tpu.memory_space<vmem>>, %arg5: memref<1x32x96xbf16, #tpu.memory_space<vmem>>, %arg6: memref<1x1x96xf32, #tpu.memory_space<vmem>>, %arg7: memref<1x32x32xbf16, #tpu.memory_space<vmem>>, %arg8: memref<1x32x64xbf16, #tpu.memory_space<vmem>>, %arg9: memref<1x1x64xf32, #tpu.memory_space<vmem>>, %arg10: memref<1x64x32xbf16, #tpu.memory_space<vmem>>, %arg11: memref<1x6x32xf32, #tpu.memory_space<vmem>>, %arg12: memref<2x32x32xbf16, #tpu.memory_space<vmem>>, %arg13: memref<4x32xf32, #tpu.memory_space<vmem>>, %arg14: memref<32x128xbf16, #tpu.memory_space<vmem>>, %arg15: memref<1x128xf32, #tpu.memory_space<vmem>>, %arg16: memref<32x2xf32, #tpu.memory_space<vmem>>, %arg17: memref<1x2xf32, #tpu.memory_space<vmem>>, %arg18: memref<1x8x32xf32, #tpu.memory_space<vmem>>, %arg19: memref<1x8x128xf32, #tpu.memory_space<vmem>>, %arg20: memref<1x1x128xf32, #tpu.memory_space<vmem>>, %arg21: memref<1x8x32xf32, #tpu.memory_space<vmem>>) attributes {dimension_semantics = [#tpu.dimension_semantics<parallel>, #tpu.dimension_semantics<arbitrary>], iteration_bounds = array<i64: 2, 2>, scalar_prefetch = 0 : i64, scratch_operands = 1 : i64, tpu.core_type = #tpu.core_type<tc>, window_params = [{transform_indices = @transform_0, window_bounds = array<i64: 1, 8, 32>}, {transform_indices = @transform_1, window_bounds = array<i64: 1, 1, 8>}, {pipeline_mode = #tpu.pipeline_mode<synchronous>, transform_indices = @transform_2, window_bounds = array<i64: 2, 32>}, {transform_indices = @transform_3, window_bounds = array<i64: 1, 32, 96>}, {transform_indices = @transform_4, window_bounds = array<i64: 1, 1, 96>}, {transform_indices = @transform_5, window_bounds = array<i64: 1, 32, 32>}, {transform_indices = @transform_6, window_bounds = array<i64: 1, 32, 64>}, {transform_indices = @transform_7, window_bounds = array<i64: 1, 1, 64>}, {transform_indices = @transform_8, window_bounds = array<i64: 1, 64, 32>}, {transform_indices = @transform_9, window_bounds = array<i64: 1, 6, 32>}, {pipeline_mode = #tpu.pipeline_mode<synchronous>, transform_indices = @transform_10, window_bounds = array<i64: 2, 32, 32>}, {pipeline_mode = #tpu.pipeline_mode<synchronous>, transform_indices = @transform_11, window_bounds = array<i64: 4, 32>}, {pipeline_mode = #tpu.pipeline_mode<synchronous>, transform_indices = @transform_12, window_bounds = array<i64: 32, 128>}, {pipeline_mode = #tpu.pipeline_mode<synchronous>, transform_indices = @transform_13, window_bounds = array<i64: 1, 128>}, {pipeline_mode = #tpu.pipeline_mode<synchronous>, transform_indices = @transform_14, window_bounds = array<i64: 32, 2>}, {pipeline_mode = #tpu.pipeline_mode<synchronous>, transform_indices = @transform_15, window_bounds = array<i64: 1, 2>}, {transform_indices = @transform_16, window_bounds = array<i64: 1, 8, 32>}, {transform_indices = @transform_17, window_bounds = array<i64: 1, 8, 128>}, {transform_indices = @transform_18, window_bounds = array<i64: 1, 1, 128>}]} {
    %c0_i32 = arith.constant 0 : i32
    %0 = arith.cmpi eq, %arg1, %c0_i32 : i32
    %1 = arith.extui %0 : i1 to i32
    %c0_i32_0 = arith.constant 0 : i32
    %2 = arith.cmpi ne, %1, %c0_i32_0 : i32
    scf.if %2 {
      %c0_62 = arith.constant 0 : index
      %c0_63 = arith.constant 0 : index
      %c0_64 = arith.constant 0 : index
      %160 = vector.load %arg2[%c0_62, %c0_63, %c0_64] : memref<1x8x32xf32, #tpu.memory_space<vmem>>, vector<1x8x32xf32>
      %c0_65 = arith.constant 0 : index
      %c0_66 = arith.constant 0 : index
      %161 = vector.load %arg4[%c0_65, %c0_66] : memref<2x32xf32, #tpu.memory_space<vmem>>, vector<1x32xf32>
      %c1_67 = arith.constant 1 : index
      %c0_68 = arith.constant 0 : index
      %162 = vector.load %arg4[%c1_67, %c0_68] : memref<2x32xf32, #tpu.memory_space<vmem>>, vector<1x32xf32>
      %cst_69 = arith.constant dense<0.000000e+00> : vector<1x8xf32>
      %163 = vector.multi_reduction <add>, %160, %cst_69 [2] : vector<1x8x32xf32> to vector<1x8xf32>
      %164 = vector.shape_cast %163 : vector<1x8xf32> to vector<1x8x1xf32>
      %cst_70 = arith.constant 3.200000e+01 : f32
      %165 = vector.broadcast %cst_70 : f32 to vector<1x8x1xf32>
      %166 = arith.divf %164, %165 : vector<1x8x1xf32>
      %167 = vector.broadcast %166 : vector<1x8x1xf32> to vector<1x8x32xf32>
      %168 = arith.subf %160, %167 : vector<1x8x32xf32>
      %169 = arith.mulf %168, %168 : vector<1x8x32xf32>
      %cst_71 = arith.constant dense<0.000000e+00> : vector<1x8xf32>
      %170 = vector.multi_reduction <add>, %169, %cst_71 [2] : vector<1x8x32xf32> to vector<1x8xf32>
      %171 = vector.shape_cast %170 : vector<1x8xf32> to vector<1x8x1xf32>
      %cst_72 = arith.constant 3.200000e+01 : f32
      %172 = vector.broadcast %cst_72 : f32 to vector<1x8x1xf32>
      %173 = arith.divf %171, %172 : vector<1x8x1xf32>
      %cst_73 = arith.constant 9.99999996E-13 : f32
      %174 = vector.broadcast %cst_73 : f32 to vector<1x8x1xf32>
      %175 = arith.addf %173, %174 : vector<1x8x1xf32>
      %176 = math.rsqrt %175 : vector<1x8x1xf32>
      %177 = vector.broadcast %176 : vector<1x8x1xf32> to vector<1x8x32xf32>
      %178 = arith.mulf %168, %177 : vector<1x8x32xf32>
      %179 = vector.shape_cast %161 : vector<1x32xf32> to vector<1x1x32xf32>
      %180 = vector.broadcast %179 : vector<1x1x32xf32> to vector<1x8x32xf32>
      %181 = arith.mulf %178, %180 : vector<1x8x32xf32>
      %182 = vector.shape_cast %162 : vector<1x32xf32> to vector<1x1x32xf32>
      %183 = vector.broadcast %182 : vector<1x1x32xf32> to vector<1x8x32xf32>
      %184 = arith.addf %181, %183 : vector<1x8x32xf32>
      %c0_74 = arith.constant 0 : index
      %c0_75 = arith.constant 0 : index
      %c0_76 = arith.constant 0 : index
      %185 = vector.load %arg21[%c0_74, %c0_75, %c0_76] : memref<1x8x32xf32, #tpu.memory_space<vmem>>, vector<1x8x32xf32>
      tpu.vector_store %arg21[%c0_74, %c0_75, %c0_76], %184 {strides = array<i32>} : memref<1x8x32xf32, #tpu.memory_space<vmem>>, vector<1x8x32xf32>,
    } else {
    }
    %c0 = arith.constant 0 : index
    %c0_1 = arith.constant 0 : index
    %c0_2 = arith.constant 0 : index
    %3 = vector.load %arg21[%c0, %c0_1, %c0_2] : memref<1x8x32xf32, #tpu.memory_space<vmem>>, vector<1x8x32xf32>
    %4 = vector.shape_cast %3 : vector<1x8x32xf32> to vector<8x32xf32>
    %5 = arith.truncf %4 : vector<8x32xf32> to vector<8x32xbf16>
    %c0_3 = arith.constant 0 : index
    %c0_4 = arith.constant 0 : index
    %c0_5 = arith.constant 0 : index
    %6 = vector.load %arg5[%c0_3, %c0_4, %c0_5] : memref<1x32x96xbf16, #tpu.memory_space<vmem>>, vector<1x32x96xbf16>
    %7 = vector.shape_cast %6 : vector<1x32x96xbf16> to vector<32x96xbf16>
    %cst = arith.constant dense<0.000000e+00> : vector<8x96xf32>
    %8 = tpu.matmul %5, %7, %cst {dimension_numbers = #tpu.dot_dimension_numbers<[1], [0], [0], [1], [0, 0, 1, 1], [], []>} : vector<8x32xbf16>, vector<32x96xbf16>, vector<8x96xf32> -> vector<8x96xf32>
    %c0_6 = arith.constant 0 : index
    %c0_7 = arith.constant 0 : index
    %c0_8 = arith.constant 0 : index
    %9 = vector.load %arg6[%c0_6, %c0_7, %c0_8] : memref<1x1x96xf32, #tpu.memory_space<vmem>>, vector<1x1x96xf32>
    %10 = vector.shape_cast %9 : vector<1x1x96xf32> to vector<1x96xf32>
    %11 = vector.broadcast %10 : vector<1x96xf32> to vector<8x96xf32>
    %12 = arith.addf %8, %11 : vector<8x96xf32>
    %13 = vector.extract_strided_slice %12 {offsets = [0, 0], sizes = [8, 32], strides = [1, 1]} : vector<8x96xf32> to vector<8x32xf32>
    %14 = vector.shape_cast %13 : vector<8x32xf32> to vector<1x8x32xf32>
    %15 = vector.extract_strided_slice %12 {offsets = [0, 32], sizes = [8, 32], strides = [1, 1]} : vector<8x96xf32> to vector<8x32xf32>
    %16 = vector.shape_cast %15 : vector<8x32xf32> to vector<1x8x32xf32>
    %17 = vector.extract_strided_slice %12 {offsets = [0, 64], sizes = [8, 32], strides = [1, 1]} : vector<8x96xf32> to vector<8x32xf32>
    %18 = vector.shape_cast %17 : vector<8x32xf32> to vector<1x8x32xf32>
    %19 = vector.extract_strided_slice %14 {offsets = [0, 0, 0], sizes = [1, 8, 8], strides = [1, 1, 1]} : vector<1x8x32xf32> to vector<1x8x8xf32>
    %20 = vector.extract_strided_slice %14 {offsets = [0, 0, 8], sizes = [1, 8, 8], strides = [1, 1, 1]} : vector<1x8x32xf32> to vector<1x8x8xf32>
    %21 = vector.extract_strided_slice %14 {offsets = [0, 0, 16], sizes = [1, 8, 8], strides = [1, 1, 1]} : vector<1x8x32xf32> to vector<1x8x8xf32>
    %22 = vector.extract_strided_slice %14 {offsets = [0, 0, 24], sizes = [1, 8, 8], strides = [1, 1, 1]} : vector<1x8x32xf32> to vector<1x8x8xf32>
    %23 = tpu.concatenate %19, %20, %21, %22 in 0 : vector<1x8x8xf32>, vector<1x8x8xf32>, vector<1x8x8xf32>, vector<1x8x8xf32> -> vector<4x8x8xf32>
    %24 = arith.truncf %23 : vector<4x8x8xf32> to vector<4x8x8xbf16>
    %25 = vector.extract_strided_slice %16 {offsets = [0, 0, 0], sizes = [1, 8, 8], strides = [1, 1, 1]} : vector<1x8x32xf32> to vector<1x8x8xf32>
    %26 = vector.extract_strided_slice %16 {offsets = [0, 0, 8], sizes = [1, 8, 8], strides = [1, 1, 1]} : vector<1x8x32xf32> to vector<1x8x8xf32>
    %27 = vector.extract_strided_slice %16 {offsets = [0, 0, 16], sizes = [1, 8, 8], strides = [1, 1, 1]} : vector<1x8x32xf32> to vector<1x8x8xf32>
    %28 = vector.extract_strided_slice %16 {offsets = [0, 0, 24], sizes = [1, 8, 8], strides = [1, 1, 1]} : vector<1x8x32xf32> to vector<1x8x8xf32>
    %29 = tpu.concatenate %25, %26, %27, %28 in 0 : vector<1x8x8xf32>, vector<1x8x8xf32>, vector<1x8x8xf32>, vector<1x8x8xf32> -> vector<4x8x8xf32>
    %30 = arith.truncf %29 : vector<4x8x8xf32> to vector<4x8x8xbf16>
    %31 = vector.extract_strided_slice %18 {offsets = [0, 0, 0], sizes = [1, 8, 8], strides = [1, 1, 1]} : vector<1x8x32xf32> to vector<1x8x8xf32>
    %32 = vector.extract_strided_slice %18 {offsets = [0, 0, 8], sizes = [1, 8, 8], strides = [1, 1, 1]} : vector<1x8x32xf32> to vector<1x8x8xf32>
    %33 = vector.extract_strided_slice %18 {offsets = [0, 0, 16], sizes = [1, 8, 8], strides = [1, 1, 1]} : vector<1x8x32xf32> to vector<1x8x8xf32>
    %34 = vector.extract_strided_slice %18 {offsets = [0, 0, 24], sizes = [1, 8, 8], strides = [1, 1, 1]} : vector<1x8x32xf32> to vector<1x8x8xf32>
    %35 = tpu.concatenate %31, %32, %33, %34 in 0 : vector<1x8x8xf32>, vector<1x8x8xf32>, vector<1x8x8xf32>, vector<1x8x8xf32> -> vector<4x8x8xf32>
    %36 = arith.truncf %35 : vector<4x8x8xf32> to vector<4x8x8xbf16>
    "tpu.trace_start"() <{level = 10 : i32, message = "bqd,bkd->bqk"}> : () -> ()
    %cst_9 = arith.constant dense<0.000000e+00> : vector<4x8x8xf32>
    %37 = tpu.matmul %24, %30, %cst_9 {dimension_numbers = #tpu.dot_dimension_numbers<[2], [2], [1], [1], [0, 0, 0, 1, 1, 1], [0], [0]>} : vector<4x8x8xbf16>, vector<4x8x8xbf16>, vector<4x8x8xf32> -> vector<4x8x8xf32>
    "tpu.trace_stop"() : () -> ()
    %cst_10 = arith.constant 0.353553385 : f32
    %38 = vector.broadcast %cst_10 : f32 to vector<4x8x8xf32>
    %39 = arith.mulf %37, %38 : vector<4x8x8xf32>
    %40 = vector.shape_cast %39 : vector<4x8x8xf32> to vector<4x1x8x8xf32>
    %c0_11 = arith.constant 0 : index
    %c0_12 = arith.constant 0 : index
    %c0_13 = arith.constant 0 : index
    %41 = vector.load %arg3[%c0_11, %c0_12, %c0_13] : memref<1x1x8xf32, #tpu.memory_space<vmem>>, vector<1x1x8xf32>
    %42 = vector.shape_cast %41 : vector<1x1x8xf32> to vector<1x1x1x8xf32>
    %43 = vector.broadcast %42 : vector<1x1x1x8xf32> to vector<4x1x8x8xf32>
    %44 = arith.addf %40, %43 : vector<4x1x8x8xf32>
    %45 = vector.shape_cast %44 : vector<4x1x8x8xf32> to vector<4x8x8xf32>
    %cst_14 = arith.constant dense<0xFF800000> : vector<4x8xf32>
    %46 = vector.multi_reduction <maximumf>, %45, %cst_14 [2] : vector<4x8x8xf32> to vector<4x8xf32>
    %47 = vector.shape_cast %46 : vector<4x8xf32> to vector<4x8x1xf32>
    %48 = vector.broadcast %47 : vector<4x8x1xf32> to vector<4x8x8xf32>
    %49 = arith.subf %45, %48 : vector<4x8x8xf32>
    %50 = math.exp %49 : vector<4x8x8xf32>
    %cst_15 = arith.constant dense<0.000000e+00> : vector<4x8xf32>
    %51 = vector.multi_reduction <add>, %50, %cst_15 [2] : vector<4x8x8xf32> to vector<4x8xf32>
    %52 = vector.shape_cast %51 : vector<4x8xf32> to vector<4x8x1xf32>
    %53 = tpu.reciprocal %52 {approx = true} : vector<4x8x1xf32> -> vector<4x8x1xf32>
    %54 = vector.broadcast %53 : vector<4x8x1xf32> to vector<4x8x8xf32>
    %55 = arith.mulf %50, %54 : vector<4x8x8xf32>
    %56 = arith.truncf %55 : vector<4x8x8xf32> to vector<4x8x8xbf16>
    "tpu.trace_start"() <{level = 10 : i32, message = "bqk,bkd->bqd"}> : () -> ()
    %cst_16 = arith.constant dense<0.000000e+00> : vector<4x8x8xf32>
    %57 = tpu.matmul %56, %36, %cst_16 {dimension_numbers = #tpu.dot_dimension_numbers<[2], [1], [1], [2], [0, 0, 0, 1, 1, 2], [0], [0]>} : vector<4x8x8xbf16>, vector<4x8x8xbf16>, vector<4x8x8xf32> -> vector<4x8x8xf32>
    "tpu.trace_stop"() : () -> ()
    %58 = vector.extract_strided_slice %57 {offsets = [0, 0, 0], sizes = [1, 8, 8], strides = [1, 1, 1]} : vector<4x8x8xf32> to vector<1x8x8xf32>
    %59 = vector.shape_cast %58 : vector<1x8x8xf32> to vector<8x8xf32>
    %60 = vector.extract_strided_slice %57 {offsets = [1, 0, 0], sizes = [1, 8, 8], strides = [1, 1, 1]} : vector<4x8x8xf32> to vector<1x8x8xf32>
    %61 = vector.shape_cast %60 : vector<1x8x8xf32> to vector<8x8xf32>
    %62 = vector.extract_strided_slice %57 {offsets = [2, 0, 0], sizes = [1, 8, 8], strides = [1, 1, 1]} : vector<4x8x8xf32> to vector<1x8x8xf32>
    %63 = vector.shape_cast %62 : vector<1x8x8xf32> to vector<8x8xf32>
    %64 = vector.extract_strided_slice %57 {offsets = [3, 0, 0], sizes = [1, 8, 8], strides = [1, 1, 1]} : vector<4x8x8xf32> to vector<1x8x8xf32>
    %65 = vector.shape_cast %64 : vector<1x8x8xf32> to vector<8x8xf32>
    %66 = tpu.concatenate %59, %61, %63, %65 in 1 : vector<8x8xf32>, vector<8x8xf32>, vector<8x8xf32>, vector<8x8xf32> -> vector<8x32xf32>
    %67 = arith.truncf %66 : vector<8x32xf32> to vector<8x32xbf16>
    %c0_17 = arith.constant 0 : index
    %c0_18 = arith.constant 0 : index
    %c0_19 = arith.constant 0 : index
    %68 = vector.load %arg7[%c0_17, %c0_18, %c0_19] : memref<1x32x32xbf16, #tpu.memory_space<vmem>>, vector<1x32x32xbf16>
    %69 = vector.shape_cast %68 : vector<1x32x32xbf16> to vector<32x32xbf16>
    %cst_20 = arith.constant dense<0.000000e+00> : vector<8x32xf32>
    %70 = tpu.matmul %67, %69, %cst_20 {dimension_numbers = #tpu.dot_dimension_numbers<[1], [0], [0], [1], [0, 0, 1, 1], [], []>} : vector<8x32xbf16>, vector<32x32xbf16>, vector<8x32xf32> -> vector<8x32xf32>
    %c0_21 = arith.constant 0 : index
    %c0_22 = arith.constant 0 : index
    %c0_23 = arith.constant 0 : index
    %71 = vector.load %arg11[%c0_21, %c0_22, %c0_23] : memref<1x6x32xf32, #tpu.memory_space<vmem>>, vector<1x1x32xf32>
    %72 = vector.shape_cast %71 : vector<1x1x32xf32> to vector<1x32xf32>
    %73 = vector.broadcast %72 : vector<1x32xf32> to vector<8x32xf32>
    %74 = arith.addf %70, %73 : vector<8x32xf32>
    %75 = vector.shape_cast %74 : vector<8x32xf32> to vector<1x8x32xf32>
    %76 = arith.addf %75, %3 : vector<1x8x32xf32>
    %c0_24 = arith.constant 0 : index
    %c1 = arith.constant 1 : index
    %c0_25 = arith.constant 0 : index
    %77 = vector.load %arg11[%c0_24, %c1, %c0_25] : memref<1x6x32xf32, #tpu.memory_space<vmem>>, vector<1x1x32xf32>
    %78 = vector.shape_cast %77 : vector<1x1x32xf32> to vector<1x32xf32>
    %c0_26 = arith.constant 0 : index
    %c2 = arith.constant 2 : index
    %c0_27 = arith.constant 0 : index
    %79 = vector.load %arg11[%c0_26, %c2, %c0_27] : memref<1x6x32xf32, #tpu.memory_space<vmem>>, vector<1x1x32xf32>
    %80 = vector.shape_cast %79 : vector<1x1x32xf32> to vector<1x32xf32>
    %cst_28 = arith.constant dense<0.000000e+00> : vector<1x8xf32>
    %81 = vector.multi_reduction <add>, %76, %cst_28 [2] : vector<1x8x32xf32> to vector<1x8xf32>
    %82 = vector.shape_cast %81 : vector<1x8xf32> to vector<1x8x1xf32>
    %cst_29 = arith.constant 3.200000e+01 : f32
    %83 = vector.broadcast %cst_29 : f32 to vector<1x8x1xf32>
    %84 = arith.divf %82, %83 : vector<1x8x1xf32>
    %85 = vector.broadcast %84 : vector<1x8x1xf32> to vector<1x8x32xf32>
    %86 = arith.subf %76, %85 : vector<1x8x32xf32>
    %87 = arith.mulf %86, %86 : vector<1x8x32xf32>
    %cst_30 = arith.constant dense<0.000000e+00> : vector<1x8xf32>
    %88 = vector.multi_reduction <add>, %87, %cst_30 [2] : vector<1x8x32xf32> to vector<1x8xf32>
    %89 = vector.shape_cast %88 : vector<1x8xf32> to vector<1x8x1xf32>
    %cst_31 = arith.constant 3.200000e+01 : f32
    %90 = vector.broadcast %cst_31 : f32 to vector<1x8x1xf32>
    %91 = arith.divf %89, %90 : vector<1x8x1xf32>
    %cst_32 = arith.constant 9.99999996E-13 : f32
    %92 = vector.broadcast %cst_32 : f32 to vector<1x8x1xf32>
    %93 = arith.addf %91, %92 : vector<1x8x1xf32>
    %94 = math.rsqrt %93 : vector<1x8x1xf32>
    %95 = vector.broadcast %94 : vector<1x8x1xf32> to vector<1x8x32xf32>
    %96 = arith.mulf %86, %95 : vector<1x8x32xf32>
    %97 = vector.shape_cast %78 : vector<1x32xf32> to vector<1x1x32xf32>
    %98 = vector.broadcast %97 : vector<1x1x32xf32> to vector<1x8x32xf32>
    %99 = arith.mulf %96, %98 : vector<1x8x32xf32>
    %100 = vector.shape_cast %80 : vector<1x32xf32> to vector<1x1x32xf32>
    %101 = vector.broadcast %100 : vector<1x1x32xf32> to vector<1x8x32xf32>
    %102 = arith.addf %99, %101 : vector<1x8x32xf32>
    %103 = vector.shape_cast %102 : vector<1x8x32xf32> to vector<8x32xf32>
    %104 = arith.truncf %103 : vector<8x32xf32> to vector<8x32xbf16>
    %c0_33 = arith.constant 0 : index
    %c0_34 = arith.constant 0 : index
    %c0_35 = arith.constant 0 : index
    %105 = vector.load %arg8[%c0_33, %c0_34, %c0_35] : memref<1x32x64xbf16, #tpu.memory_space<vmem>>, vector<1x32x64xbf16>
    %106 = vector.shape_cast %105 : vector<1x32x64xbf16> to vector<32x64xbf16>
    %cst_36 = arith.constant dense<0.000000e+00> : vector<8x64xf32>
    %107 = tpu.matmul %104, %106, %cst_36 {dimension_numbers = #tpu.dot_dimension_numbers<[1], [0], [0], [1], [0, 0, 1, 1], [], []>} : vector<8x32xbf16>, vector<32x64xbf16>, vector<8x64xf32> -> vector<8x64xf32>
    %c0_37 = arith.constant 0 : index
    %c0_38 = arith.constant 0 : index
    %c0_39 = arith.constant 0 : index
    %108 = vector.load %arg9[%c0_37, %c0_38, %c0_39] : memref<1x1x64xf32, #tpu.memory_space<vmem>>, vector<1x1x64xf32>
    %109 = vector.shape_cast %108 : vector<1x1x64xf32> to vector<1x64xf32>
    %110 = vector.broadcast %109 : vector<1x64xf32> to vector<8x64xf32>
    %111 = arith.addf %107, %110 : vector<8x64xf32>
    %cst_40 = arith.constant 5.000000e-01 : f32
    %112 = vector.broadcast %cst_40 : f32 to vector<8x64xf32>
    %113 = arith.mulf %112, %111 : vector<8x64xf32>
    %cst_41 = arith.constant 1.41421354 : f32
    %114 = vector.broadcast %cst_41 : f32 to vector<8x64xf32>
    %115 = arith.divf %111, %114 : vector<8x64xf32>
    %116 = math.erf %115 : vector<8x64xf32>
    %cst_42 = arith.constant 1.000000e+00 : f32
    %117 = vector.broadcast %cst_42 : f32 to vector<8x64xf32>
    %118 = arith.addf %117, %116 : vector<8x64xf32>
    %119 = arith.mulf %113, %118 : vector<8x64xf32>
    %120 = arith.truncf %119 : vector<8x64xf32> to vector<8x64xbf16>
    %c0_43 = arith.constant 0 : index
    %c0_44 = arith.constant 0 : index
    %c0_45 = arith.constant 0 : index
    %121 = vector.load %arg10[%c0_43, %c0_44, %c0_45] : memref<1x64x32xbf16, #tpu.memory_space<vmem>>, vector<1x64x32xbf16>
    %122 = vector.shape_cast %121 : vector<1x64x32xbf16> to vector<64x32xbf16>
    %cst_46 = arith.constant dense<0.000000e+00> : vector<8x32xf32>
    %123 = tpu.matmul %120, %122, %cst_46 {dimension_numbers = #tpu.dot_dimension_numbers<[1], [0], [0], [1], [0, 0, 1, 1], [], []>} : vector<8x64xbf16>, vector<64x32xbf16>, vector<8x32xf32> -> vector<8x32xf32>
    %c0_47 = arith.constant 0 : index
    %c3 = arith.constant 3 : index
    %c0_48 = arith.constant 0 : index
    %124 = vector.load %arg11[%c0_47, %c3, %c0_48] : memref<1x6x32xf32, #tpu.memory_space<vmem>>, vector<1x1x32xf32>
    %125 = vector.shape_cast %124 : vector<1x1x32xf32> to vector<1x32xf32>
    %126 = vector.broadcast %125 : vector<1x32xf32> to vector<8x32xf32>
    %127 = arith.addf %123, %126 : vector<8x32xf32>
    %128 = vector.shape_cast %127 : vector<8x32xf32> to vector<1x8x32xf32>
    %129 = arith.addf %128, %102 : vector<1x8x32xf32>
    %c0_49 = arith.constant 0 : index
    %c4 = arith.constant 4 : index
    %c0_50 = arith.constant 0 : index
    %130 = vector.load %arg11[%c0_49, %c4, %c0_50] : memref<1x6x32xf32, #tpu.memory_space<vmem>>, vector<1x1x32xf32>
    %131 = vector.shape_cast %130 : vector<1x1x32xf32> to vector<1x32xf32>
    %c0_51 = arith.constant 0 : index
    %c5 = arith.constant 5 : index
    %c0_52 = arith.constant 0 : index
    %132 = vector.load %arg11[%c0_51, %c5, %c0_52] : memref<1x6x32xf32, #tpu.memory_space<vmem>>, vector<1x1x32xf32>
    %133 = vector.shape_cast %132 : vector<1x1x32xf32> to vector<1x32xf32>
    %cst_53 = arith.constant dense<0.000000e+00> : vector<1x8xf32>
    %134 = vector.multi_reduction <add>, %129, %cst_53 [2] : vector<1x8x32xf32> to vector<1x8xf32>
    %135 = vector.shape_cast %134 : vector<1x8xf32> to vector<1x8x1xf32>
    %cst_54 = arith.constant 3.200000e+01 : f32
    %136 = vector.broadcast %cst_54 : f32 to vector<1x8x1xf32>
    %137 = arith.divf %135, %136 : vector<1x8x1xf32>
    %138 = vector.broadcast %137 : vector<1x8x1xf32> to vector<1x8x32xf32>
    %139 = arith.subf %129, %138 : vector<1x8x32xf32>
    %140 = arith.mulf %139, %139 : vector<1x8x32xf32>
    %cst_55 = arith.constant dense<0.000000e+00> : vector<1x8xf32>
    %141 = vector.multi_reduction <add>, %140, %cst_55 [2] : vector<1x8x32xf32> to vector<1x8xf32>
    %142 = vector.shape_cast %141 : vector<1x8xf32> to vector<1x8x1xf32>
    %cst_56 = arith.constant 3.200000e+01 : f32
    %143 = vector.broadcast %cst_56 : f32 to vector<1x8x1xf32>
    %144 = arith.divf %142, %143 : vector<1x8x1xf32>
    %cst_57 = arith.constant 9.99999996E-13 : f32
    %145 = vector.broadcast %cst_57 : f32 to vector<1x8x1xf32>
    %146 = arith.addf %144, %145 : vector<1x8x1xf32>
    %147 = math.rsqrt %146 : vector<1x8x1xf32>
    %148 = vector.broadcast %147 : vector<1x8x1xf32> to vector<1x8x32xf32>
    %149 = arith.mulf %139, %148 : vector<1x8x32xf32>
    %150 = vector.shape_cast %131 : vector<1x32xf32> to vector<1x1x32xf32>
    %151 = vector.broadcast %150 : vector<1x1x32xf32> to vector<1x8x32xf32>
    %152 = arith.mulf %149, %151 : vector<1x8x32xf32>
    %153 = vector.shape_cast %133 : vector<1x32xf32> to vector<1x1x32xf32>
    %154 = vector.broadcast %153 : vector<1x1x32xf32> to vector<1x8x32xf32>
    %155 = arith.addf %152, %154 : vector<1x8x32xf32>
    %c0_58 = arith.constant 0 : index
    %c0_59 = arith.constant 0 : index
    %c0_60 = arith.constant 0 : index
    %156 = vector.load %arg21[%c0_58, %c0_59, %c0_60] : memref<1x8x32xf32, #tpu.memory_space<vmem>>, vector<1x8x32xf32>
    tpu.vector_store %arg21[%c0_58, %c0_59, %c0_60], %155 {strides = array<i32>} : memref<1x8x32xf32, #tpu.memory_space<vmem>>, vector<1x8x32xf32>,
    %c1_i32 = arith.constant 1 : i32
    %157 = arith.cmpi eq, %arg1, %c1_i32 : i32
    %158 = arith.extui %157 : i1 to i32
    %c0_i32_61 = arith.constant 0 : i32
    %159 = arith.cmpi ne, %158, %c0_i32_61 : i32
    scf.if %159 {
      %c0_62 = arith.constant 0 : index
      %c0_63 = arith.constant 0 : index
      %c0_64 = arith.constant 0 : index
      %160 = vector.load %arg18[%c0_62, %c0_63, %c0_64] : memref<1x8x32xf32, #tpu.memory_space<vmem>>, vector<1x8x32xf32>
      tpu.vector_store %arg18[%c0_62, %c0_63, %c0_64], %155 {strides = array<i32>} : memref<1x8x32xf32, #tpu.memory_space<vmem>>, vector<1x8x32xf32>,
      %161 = vector.extract_strided_slice %155 {offsets = [0, 0, 0], sizes = [1, 1, 32], strides = [1, 1, 1]} : vector<1x8x32xf32> to vector<1x1x32xf32>
      %162 = vector.shape_cast %161 : vector<1x1x32xf32> to vector<1x32xf32>
      %163 = arith.truncf %162 : vector<1x32xf32> to vector<1x32xbf16>
      %c0_65 = arith.constant 0 : index
      %c0_66 = arith.constant 0 : index
      %c0_67 = arith.constant 0 : index
      %164 = vector.load %arg12[%c0_65, %c0_66, %c0_67] : memref<2x32x32xbf16, #tpu.memory_space<vmem>>, vector<1x32x32xbf16>
      %165 = vector.shape_cast %164 : vector<1x32x32xbf16> to vector<32x32xbf16>
      %cst_68 = arith.constant dense<0.000000e+00> : vector<1x32xf32>
      %166 = tpu.matmul %163, %165, %cst_68 {dimension_numbers = #tpu.dot_dimension_numbers<[1], [0], [0], [1], [0, 0, 1, 1], [], []>} : vector<1x32xbf16>, vector<32x32xbf16>, vector<1x32xf32> -> vector<1x32xf32>
      %c0_69 = arith.constant 0 : index
      %c0_70 = arith.constant 0 : index
      %167 = vector.load %arg13[%c0_69, %c0_70] : memref<4x32xf32, #tpu.memory_space<vmem>>, vector<1x32xf32>
      %168 = arith.addf %166, %167 : vector<1x32xf32>
      %169 = math.tanh %168 : vector<1x32xf32>
      %c0_71 = arith.constant 0 : index
      %c0_72 = arith.constant 0 : index
      %170 = vector.load %arg16[%c0_71, %c0_72] : memref<32x2xf32, #tpu.memory_space<vmem>>, vector<32x2xf32>
      %cst_73 = arith.constant dense<0.000000e+00> : vector<1x2xf32>
      %171 = tpu.matmul %169, %170, %cst_73 {dimension_numbers = #tpu.dot_dimension_numbers<[1], [0], [0], [1], [0, 0, 1, 1], [], []>} : vector<1x32xf32>, vector<32x2xf32>, vector<1x2xf32> -> vector<1x2xf32>
      %c0_74 = arith.constant 0 : index
      %c0_75 = arith.constant 0 : index
      %172 = vector.load %arg17[%c0_74, %c0_75] : memref<1x2xf32, #tpu.memory_space<vmem>>, vector<1x2xf32>
      %173 = arith.addf %171, %172 : vector<1x2xf32>
      %cst_76 = arith.constant 0.000000e+00 : f32
      %174 = vector.broadcast %cst_76 : f32 to vector<1x94xf32>
      %175 = tpu.concatenate %169, %173, %174 in 1 : vector<1x32xf32>, vector<1x2xf32>, vector<1x94xf32> -> vector<1x128xf32>
      %176 = vector.shape_cast %175 : vector<1x128xf32> to vector<1x1x128xf32>
      %c0_77 = arith.constant 0 : index
      %c0_78 = arith.constant 0 : index
      %c0_79 = arith.constant 0 : index
      %177 = vector.load %arg20[%c0_77, %c0_78, %c0_79] : memref<1x1x128xf32, #tpu.memory_space<vmem>>, vector<1x1x128xf32>
      tpu.vector_store %arg20[%c0_77, %c0_78, %c0_79], %176 {strides = array<i32>} : memref<1x1x128xf32, #tpu.memory_space<vmem>>, vector<1x1x128xf32>,
      %178 = vector.shape_cast %155 : vector<1x8x32xf32> to vector<8x32xf32>
      %179 = arith.truncf %178 : vector<8x32xf32> to vector<8x32xbf16>
      %c1_80 = arith.constant 1 : index
      %c0_81 = arith.constant 0 : index
      %c0_82 = arith.constant 0 : index
      %180 = vector.load %arg12[%c1_80, %c0_81, %c0_82] : memref<2x32x32xbf16, #tpu.memory_space<vmem>>, vector<1x32x32xbf16>
      %181 = vector.shape_cast %180 : vector<1x32x32xbf16> to vector<32x32xbf16>
      %cst_83 = arith.constant dense<0.000000e+00> : vector<8x32xf32>
      %182 = tpu.matmul %179, %181, %cst_83 {dimension_numbers = #tpu.dot_dimension_numbers<[1], [0], [0], [1], [0, 0, 1, 1], [], []>} : vector<8x32xbf16>, vector<32x32xbf16>, vector<8x32xf32> -> vector<8x32xf32>
      %c1_84 = arith.constant 1 : index
      %c0_85 = arith.constant 0 : index
      %183 = vector.load %arg13[%c1_84, %c0_85] : memref<4x32xf32, #tpu.memory_space<vmem>>, vector<1x32xf32>
      %184 = vector.broadcast %183 : vector<1x32xf32> to vector<8x32xf32>
      %185 = arith.addf %182, %184 : vector<8x32xf32>
      %cst_86 = arith.constant 5.000000e-01 : f32
      %186 = vector.broadcast %cst_86 : f32 to vector<8x32xf32>
      %187 = arith.mulf %186, %185 : vector<8x32xf32>
      %cst_87 = arith.constant 1.41421354 : f32
      %188 = vector.broadcast %cst_87 : f32 to vector<8x32xf32>
      %189 = arith.divf %185, %188 : vector<8x32xf32>
      %190 = math.erf %189 : vector<8x32xf32>
      %cst_88 = arith.constant 1.000000e+00 : f32
      %191 = vector.broadcast %cst_88 : f32 to vector<8x32xf32>
      %192 = arith.addf %191, %190 : vector<8x32xf32>
      %193 = arith.mulf %187, %192 : vector<8x32xf32>
      %c2_89 = arith.constant 2 : index
      %c0_90 = arith.constant 0 : index
      %194 = vector.load %arg13[%c2_89, %c0_90] : memref<4x32xf32, #tpu.memory_space<vmem>>, vector<1x32xf32>
      %c3_91 = arith.constant 3 : index
      %c0_92 = arith.constant 0 : index
      %195 = vector.load %arg13[%c3_91, %c0_92] : memref<4x32xf32, #tpu.memory_space<vmem>>, vector<1x32xf32>
      %cst_93 = arith.constant dense<0.000000e+00> : vector<8xf32>
      %196 = vector.multi_reduction <add>, %193, %cst_93 [1] : vector<8x32xf32> to vector<8xf32>
      %197 = vector.shape_cast %196 : vector<8xf32> to vector<8x1xf32>
      %cst_94 = arith.constant 3.200000e+01 : f32
      %198 = vector.broadcast %cst_94 : f32 to vector<8x1xf32>
      %199 = arith.divf %197, %198 : vector<8x1xf32>
      %200 = vector.broadcast %199 : vector<8x1xf32> to vector<8x32xf32>
      %201 = arith.subf %193, %200 : vector<8x32xf32>
      %202 = arith.mulf %201, %201 : vector<8x32xf32>
      %cst_95 = arith.constant dense<0.000000e+00> : vector<8xf32>
      %203 = vector.multi_reduction <add>, %202, %cst_95 [1] : vector<8x32xf32> to vector<8xf32>
      %204 = vector.shape_cast %203 : vector<8xf32> to vector<8x1xf32>
      %cst_96 = arith.constant 3.200000e+01 : f32
      %205 = vector.broadcast %cst_96 : f32 to vector<8x1xf32>
      %206 = arith.divf %204, %205 : vector<8x1xf32>
      %cst_97 = arith.constant 9.99999996E-13 : f32
      %207 = vector.broadcast %cst_97 : f32 to vector<8x1xf32>
      %208 = arith.addf %206, %207 : vector<8x1xf32>
      %209 = math.rsqrt %208 : vector<8x1xf32>
      %210 = vector.broadcast %209 : vector<8x1xf32> to vector<8x32xf32>
      %211 = arith.mulf %201, %210 : vector<8x32xf32>
      %212 = vector.broadcast %194 : vector<1x32xf32> to vector<8x32xf32>
      %213 = arith.mulf %211, %212 : vector<8x32xf32>
      %214 = vector.broadcast %195 : vector<1x32xf32> to vector<8x32xf32>
      %215 = arith.addf %213, %214 : vector<8x32xf32>
      %216 = arith.truncf %215 : vector<8x32xf32> to vector<8x32xbf16>
      %c0_98 = arith.constant 0 : index
      %c0_99 = arith.constant 0 : index
      %217 = vector.load %arg14[%c0_98, %c0_99] : memref<32x128xbf16, #tpu.memory_space<vmem>>, vector<32x128xbf16>
      %cst_100 = arith.constant dense<0.000000e+00> : vector<8x128xf32>
      %218 = tpu.matmul %216, %217, %cst_100 {dimension_numbers = #tpu.dot_dimension_numbers<[1], [0], [0], [1], [0, 0, 1, 1], [], []>} : vector<8x32xbf16>, vector<32x128xbf16>, vector<8x128xf32> -> vector<8x128xf32>
      %c0_101 = arith.constant 0 : index
      %c0_102 = arith.constant 0 : index
      %219 = vector.load %arg15[%c0_101, %c0_102] : memref<1x128xf32, #tpu.memory_space<vmem>>, vector<1x128xf32>
      %220 = vector.broadcast %219 : vector<1x128xf32> to vector<8x128xf32>
      %221 = arith.addf %218, %220 : vector<8x128xf32>
      %222 = vector.shape_cast %221 : vector<8x128xf32> to vector<1x8x128xf32>
      %c0_103 = arith.constant 0 : index
      %c0_104 = arith.constant 0 : index
      %c0_105 = arith.constant 0 : index
      %223 = vector.load %arg19[%c0_103, %c0_104, %c0_105] : memref<1x8x128xf32, #tpu.memory_space<vmem>>, vector<1x8x128xf32>
      tpu.vector_store %arg19[%c0_103, %c0_104, %c0_105], %222 {strides = array<i32>} : memref<1x8x128xf32, #tpu.memory_space<vmem>>, vector<1x8x128xf32>,
    } else {
    }
    return
  }
  func.func @transform_0(%arg0: i32, %arg1: i32) -> (i32, i32, i32) {
    %c0_i32 = arith.constant 0 : i32
    %c0_i32_0 = arith.constant 0 : i32
    %c0_i32_1 = arith.constant 0 : i32
    return %arg0, %c0_i32, %c0_i32_0 : i32, i32, i32
  }
  func.func @transform_1(%arg0: i32, %arg1: i32) -> (i32, i32, i32) {
    %c0_i32 = arith.constant 0 : i32
    %c0_i32_0 = arith.constant 0 : i32
    %c0_i32_1 = arith.constant 0 : i32
    return %arg0, %c0_i32, %c0_i32_0 : i32, i32, i32
  }
  func.func @transform_2(%arg0: i32, %arg1: i32) -> (i32, i32) {
    %c0_i32 = arith.constant 0 : i32
    %c0_i32_0 = arith.constant 0 : i32
    %c0_i32_1 = arith.constant 0 : i32
    return %c0_i32, %c0_i32_0 : i32, i32
  }
  func.func @transform_3(%arg0: i32, %arg1: i32) -> (i32, i32, i32) {
    %c0_i32 = arith.constant 0 : i32
    %c0_i32_0 = arith.constant 0 : i32
    %c0_i32_1 = arith.constant 0 : i32
    return %arg1, %c0_i32, %c0_i32_0 : i32, i32, i32
  }
  func.func @transform_4(%arg0: i32, %arg1: i32) -> (i32, i32, i32) {
    %c0_i32 = arith.constant 0 : i32
    %c0_i32_0 = arith.constant 0 : i32
    %c0_i32_1 = arith.constant 0 : i32
    return %arg1, %c0_i32, %c0_i32_0 : i32, i32, i32
  }
  func.func @transform_5(%arg0: i32, %arg1: i32) -> (i32, i32, i32) {
    %c0_i32 = arith.constant 0 : i32
    %c0_i32_0 = arith.constant 0 : i32
    %c0_i32_1 = arith.constant 0 : i32
    return %arg1, %c0_i32, %c0_i32_0 : i32, i32, i32
  }
  func.func @transform_6(%arg0: i32, %arg1: i32) -> (i32, i32, i32) {
    %c0_i32 = arith.constant 0 : i32
    %c0_i32_0 = arith.constant 0 : i32
    %c0_i32_1 = arith.constant 0 : i32
    return %arg1, %c0_i32, %c0_i32_0 : i32, i32, i32
  }
  func.func @transform_7(%arg0: i32, %arg1: i32) -> (i32, i32, i32) {
    %c0_i32 = arith.constant 0 : i32
    %c0_i32_0 = arith.constant 0 : i32
    %c0_i32_1 = arith.constant 0 : i32
    return %arg1, %c0_i32, %c0_i32_0 : i32, i32, i32
  }
  func.func @transform_8(%arg0: i32, %arg1: i32) -> (i32, i32, i32) {
    %c0_i32 = arith.constant 0 : i32
    %c0_i32_0 = arith.constant 0 : i32
    %c0_i32_1 = arith.constant 0 : i32
    return %arg1, %c0_i32, %c0_i32_0 : i32, i32, i32
  }
  func.func @transform_9(%arg0: i32, %arg1: i32) -> (i32, i32, i32) {
    %c0_i32 = arith.constant 0 : i32
    %c0_i32_0 = arith.constant 0 : i32
    %c0_i32_1 = arith.constant 0 : i32
    return %arg1, %c0_i32, %c0_i32_0 : i32, i32, i32
  }
  func.func @transform_10(%arg0: i32, %arg1: i32) -> (i32, i32, i32) {
    %c0_i32 = arith.constant 0 : i32
    %c0_i32_0 = arith.constant 0 : i32
    %c0_i32_1 = arith.constant 0 : i32
    %c0_i32_2 = arith.constant 0 : i32
    return %c0_i32, %c0_i32_0, %c0_i32_1 : i32, i32, i32
  }
  func.func @transform_11(%arg0: i32, %arg1: i32) -> (i32, i32) {
    %c0_i32 = arith.constant 0 : i32
    %c0_i32_0 = arith.constant 0 : i32
    %c0_i32_1 = arith.constant 0 : i32
    return %c0_i32, %c0_i32_0 : i32, i32
  }
  func.func @transform_12(%arg0: i32, %arg1: i32) -> (i32, i32) {
    %c0_i32 = arith.constant 0 : i32
    %c0_i32_0 = arith.constant 0 : i32
    %c0_i32_1 = arith.constant 0 : i32
    return %c0_i32, %c0_i32_0 : i32, i32
  }
  func.func @transform_13(%arg0: i32, %arg1: i32) -> (i32, i32) {
    %c0_i32 = arith.constant 0 : i32
    %c0_i32_0 = arith.constant 0 : i32
    %c0_i32_1 = arith.constant 0 : i32
    return %c0_i32, %c0_i32_0 : i32, i32
  }
  func.func @transform_14(%arg0: i32, %arg1: i32) -> (i32, i32) {
    %c0_i32 = arith.constant 0 : i32
    %c0_i32_0 = arith.constant 0 : i32
    %c0_i32_1 = arith.constant 0 : i32
    return %c0_i32, %c0_i32_0 : i32, i32
  }
  func.func @transform_15(%arg0: i32, %arg1: i32) -> (i32, i32) {
    %c0_i32 = arith.constant 0 : i32
    %c0_i32_0 = arith.constant 0 : i32
    %c0_i32_1 = arith.constant 0 : i32
    return %c0_i32, %c0_i32_0 : i32, i32
  }
  func.func @transform_16(%arg0: i32, %arg1: i32) -> (i32, i32, i32) {
    %c0_i32 = arith.constant 0 : i32
    %c0_i32_0 = arith.constant 0 : i32
    %c0_i32_1 = arith.constant 0 : i32
    return %arg0, %c0_i32, %c0_i32_0 : i32, i32, i32
  }
  func.func @transform_17(%arg0: i32, %arg1: i32) -> (i32, i32, i32) {
    %c0_i32 = arith.constant 0 : i32
    %c0_i32_0 = arith.constant 0 : i32
    %c0_i32_1 = arith.constant 0 : i32
    return %arg0, %c0_i32, %c0_i32_0 : i32, i32, i32
  }
  func.func @transform_18(%arg0: i32, %arg1: i32) -> (i32, i32, i32) {
    %c0_i32 = arith.constant 0 : i32
    %c0_i32_0 = arith.constant 0 : i32
    %c0_i32_1 = arith.constant 0 : i32
    return %arg0, %c0_i32, %c0_i32_0 : i32, i32, i32
  }
}

</mosaic_0001>

<llo_original>
// kernel: tpu_custom_call.1
$region0: #{tpu_custom_call.1}
  #allocation0 [shape = 'u32[]', space=smem, size = 0x4, offset = 0x4, fixed_abs, tag = 'smem constant byte address 0x4 - core index']
  #allocation1 [shape = 'u32[144,128]{1,0:T(1,128)}', space=vmem, size = 0x12000, scoped, tag = 'internal scratch']
  #allocation2 [shape = 'f32[1,8,32]{2,1,0:T(8,128)}', space=vmem, size = 0x1000, scoped, tag = 'scratch operand']
  %s0 = inlined_call_operand.hbm [shape: f32[2,8,32], index: 0, kind: input, shape index: {}]
  %s1 = inlined_call_operand.hbm [shape: f32[2,1,8], index: 1, kind: input, shape index: {}]
  %s2 = inlined_call_operand.hbm [shape: f32[2,32], index: 2, kind: input, shape index: {}]
  %s3 = inlined_call_operand.vmem [shape: bf16[2,32,96], index: 3, kind: input, shape index: {}]
  %s4 = inlined_call_operand.hbm [shape: f32[2,1,96], index: 4, kind: input, shape index: {}]
  %s5 = inlined_call_operand.vmem [shape: bf16[2,32,32], index: 5, kind: input, shape index: {}]
  %s6 = inlined_call_operand.vmem [shape: bf16[2,32,64], index: 6, kind: input, shape index: {}]
  %s7 = inlined_call_operand.hbm [shape: f32[2,1,64], index: 7, kind: input, shape index: {}]
  %s8 = inlined_call_operand.vmem [shape: bf16[2,64,32], index: 8, kind: input, shape index: {}]
  %s9 = inlined_call_operand.vmem [shape: f32[2,6,32], index: 9, kind: input, shape index: {}]
  %s10 = inlined_call_operand.vmem [shape: bf16[2,32,32], index: 10, kind: input, shape index: {}]
  %s11 = inlined_call_operand.vmem [shape: f32[4,32], index: 11, kind: input, shape index: {}]
  %s12 = inlined_call_operand.vmem [shape: bf16[32,128], index: 12, kind: input, shape index: {}]
  %s13 = inlined_call_operand.vmem [shape: f32[1,128], index: 13, kind: input, shape index: {}]
  %s14 = inlined_call_operand.vmem [shape: f32[32,2], index: 14, kind: input, shape index: {}]
  %s15 = inlined_call_operand.vmem [shape: f32[1,2], index: 15, kind: input, shape index: {}]
  %s16 = inlined_call_operand.hbm [shape: f32[2,8,32], index: 16, kind: output, shape index: {0}]
  %s17 = inlined_call_operand.hbm [shape: f32[2,8,128], index: 17, kind: output, shape index: {1}]
  %s18 = inlined_call_operand.hbm [shape: f32[2,1,128], index: 18, kind: output, shape index: {2}]
  %19 = xla_tuple %s16, %s17, %s18
  %s20 = sld [smem:[#allocation0]]
  $region141: #{tpu_custom_call.1} parent=0
    _
  %s22 = ssub.s32 1, %s20
  %s23 = scalar_select 0, %s22, %s20
  $region1: #{tpu_custom_call.1} parent=0
    #allocation3 [shape = 'u8[8192]{0}', space=vmem, size = 0x2000, scoped, tag = 'input window, operand 0']
    #allocation4 [shape = 's32[2]{0}', space=sflag, size = 0x8, scoped, tag = 'scoped memory for tpu_custom_call.1']
    #allocation5 [shape = 's32[2]{0}', space=sflag, size = 0x8, scoped, tag = 'scoped memory for tpu_custom_call.1']
    #allocation6 [shape = 'u8[1024]{0}', space=vmem, size = 0x400, scoped, tag = 'input window, operand 1']
    #allocation7 [shape = 's32[2]{0}', space=sflag, size = 0x8, scoped, tag = 'scoped memory for tpu_custom_call.1']
    #allocation8 [shape = 'u8[1024]{0}', space=vmem, size = 0x400, scoped, tag = 'input window, operand 2, single buffered']
    #allocation9 [shape = 'u8[1024]{0}', space=vmem, size = 0x400, scoped, tag = 'input window, operand 4']
    #allocation10 [shape = 's32[2]{0}', space=sflag, size = 0x8, scoped, tag = 'scoped memory for tpu_custom_call.1']
    #allocation11 [shape = 'u8[1024]{0}', space=vmem, size = 0x400, scoped, tag = 'input window, operand 7']
    #allocation12 [shape = 'u8[8192]{0}', space=vmem, size = 0x2000, scoped, tag = 'output window, operand 0']
    #allocation13 [shape = 'u8[8192]{0}', space=vmem, size = 0x2000, scoped, tag = 'output window, operand 1']
    #allocation14 [shape = 's32[2]{0}', space=sflag, size = 0x8, scoped, tag = 'scoped memory for tpu_custom_call.1']
    #allocation15 [shape = 'u8[1024]{0}', space=vmem, size = 0x400, scoped, tag = 'output window, operand 2']
    %24 = vsyncpa [#allocation4], 0
    %s25 = scalar_lea.sflag [#allocation4], 1
    %26 = vsyncpa %s25, 0
    %27 = vsyncpa [#allocation7], 0
    %s28 = scalar_lea.sflag [#allocation7], 1
    %29 = vsyncpa %s28, 0
    %30 = vsyncpa [#allocation10], 0
    %s31 = scalar_lea.sflag [#allocation10], 1
    %32 = vsyncpa %s31, 0
    %33 = vsyncpa [#allocation5], 0
    %s34 = scalar_lea.sflag [#allocation5], 1
    %35 = vsyncpa %s34, 0
    %36 = vsyncpa [#allocation14], 0
    %s37 = scalar_lea.sflag [#allocation14], 1
    %38 = vsyncpa %s37, 0
    loop: start=0, step=1, limit=6
    $region2: #{tpu_custom_call.1} parent=1 // loop_pre_header
      _
    $region3: #{tpu_custom_call.1} parent=1 // loop_header
      %s40 = sphi 0, %s44
      %p41 = scmp.ge.s32.totalorder %s40, 6
      %s47 = sphi 0, %s59
      %s48 = sphi 0, %s55
      %s49 = sphi 0, %s47
      %s50 = sphi 0, %s48
      %s51 = sphi 0, %s49
      %s52 = sphi 0, %s50
      %s62 = sphi 0, %s64
      %s65 = sphi 0, %s62
      %s66 = sphi 0, %s65
      %s82 = sphi 0, %s66
      %s88 = sphi 0, %s90
      %s91 = sphi 0, %s88
      %s92 = sphi 0, %s91
      %s108 = sphi 0, %s92
      %s112 = sphi 0, %s112
      %s114 = sphi 0, %s112
      %s115 = sphi 0, %s114
      %s129 = sphi 0, %s115
      %s135 = sphi 0, %s137
      %s138 = sphi 0, %s135
      %s139 = sphi 0, %s138
      %s155 = sphi 0, %s139
      %s161 = sphi 0, %s163
      %s164 = sphi 0, %s161
      %s165 = sphi 0, %s164
      %s181 = sphi 0, %s165
      %s187 = sphi 0, %s189
      %s190 = sphi 0, %s187
      %s191 = sphi 0, %s190
      %s207 = sphi 0, %s191
      %s213 = sphi 0, %s215
      %s216 = sphi 0, %s213
      %s217 = sphi 0, %s216
      %s233 = sphi 0, %s217
      %s239 = sphi 0, %s241
      %s242 = sphi 0, %s239
      %s243 = sphi 0, %s242
      %s259 = sphi 0, %s243
      %s265 = sphi 0, %s267
      %s268 = sphi 0, %s265
      %s269 = sphi 0, %s268
      %s285 = sphi 0, %s269
      %s291 = sphi 0, %s293
      %s294 = sphi 0, %s291
      %s295 = sphi 0, %s294
      %s311 = sphi 0, %s295
      %s315 = sphi 0, %s315
      %s317 = sphi 0, %s315
      %s318 = sphi 0, %s317
      %s332 = sphi 0, %s318
      %s336 = sphi 0, %s336
      %s338 = sphi 0, %s336
      %s339 = sphi 0, %s338
      %s353 = sphi 0, %s339
      %s357 = sphi 0, %s357
      %s359 = sphi 0, %s357
      %s360 = sphi 0, %s359
      %s374 = sphi 0, %s360
      %s378 = sphi 0, %s378
      %s380 = sphi 0, %s378
      %s381 = sphi 0, %s380
      %s395 = sphi 0, %s381
      %s399 = sphi 0, %s399
      %s401 = sphi 0, %s399
      %s402 = sphi 0, %s401
      %s416 = sphi 0, %s402
      %s420 = sphi 0, %s420
      %s422 = sphi 0, %s420
      %s423 = sphi 0, %s422
      %s437 = sphi 0, %s423
      %s443 = sphi 0, %s445
      %s446 = sphi 0, %s443
      %s447 = sphi 0, %s446
      %s463 = sphi 0, %s447
      %s469 = sphi 0, %s471
      %s472 = sphi 0, %s469
      %s473 = sphi 0, %s472
      %s489 = sphi 0, %s473
      %s495 = sphi 0, %s497
      %s498 = sphi 0, %s495
      %s499 = sphi 0, %s498
      %s515 = sphi 0, %s499
    $region4: #{tpu_custom_call.1} parent=1 // loop_header_branch
      %43 = sbr.rel (%p41) target = $region8
    $region5: #{tpu_custom_call.1} parent=1 // loop_body
      %s45 = ssub.s32 %s40, 1
      %s46 = ssub.s32 %s40, 2
      %s53 = sadd.s32 1, %s48
      %p54 = scmp.ge.s32.totalorder %s53, 2
      %s55 = scalar_select %p54, 0, %s53
      %s56 = sadd.s32 1, %s47
      %s57 = scalar_select %p54, %s56, %s47
      %p58 = scmp.ge.s32.totalorder %s57, 2
      %s59 = scalar_select %p58, 0, %s57
      %s60 = ssub.s32 %s47, %s59
      %p61 = scmp.eq.s32.totalorder %s60, 0
      %s63 = sadd.s32 %s62, 1
      %s64 = scalar_select %p61, %s62, %s63
      %p67 = pneg %p61
      %p68 = scmp.eq.s32.totalorder %s40, 3
      %p69 = por %p67, %p68
      %p70 = scmp.ne.s32.totalorder %s62, %s65
      %p71 = scmp.eq.s32.totalorder %s40, 0
      %p72 = por %p70, %p71
      %p73 = scmp.ne.s32.totalorder %s62, %s65
      %p74 = scmp.eq.s32.totalorder %s45, 3
      %p75 = por %p73, %p74
      %p76 = scmp.ne.s32.totalorder %s65, %s66
      %p77 = scmp.eq.s32.totalorder %s45, 0
      %p78 = por %p76, %p77
      %p79 = scmp.ne.s32.totalorder %s65, %s66
      %p80 = scmp.eq.s32.totalorder %s46, 3
      %p81 = por %p79, %p80
      %p83 = scmp.ne.s32.totalorder %s66, %s82
      %p84 = scmp.eq.s32.totalorder %s46, 0
      %p85 = por %p83, %p84
      %s86 = ssub.s32 %s47, %s59
      %p87 = scmp.eq.s32.totalorder %s86, 0
      %s89 = sadd.s32 %s88, 1
      %s90 = scalar_select %p87, %s88, %s89
      %p93 = pneg %p87
      %p94 = scmp.eq.s32.totalorder %s40, 3
      %p95 = por %p93, %p94
      %p96 = scmp.ne.s32.totalorder %s88, %s91
      %p97 = scmp.eq.s32.totalorder %s40, 0
      %p98 = por %p96, %p97
      %p99 = scmp.ne.s32.totalorder %s88, %s91
      %p100 = scmp.eq.s32.totalorder %s45, 3
      %p101 = por %p99, %p100
      %p102 = scmp.ne.s32.totalorder %s91, %s92
      %p103 = scmp.eq.s32.totalorder %s45, 0
      %p104 = por %p102, %p103
      %p105 = scmp.ne.s32.totalorder %s91, %s92
      %p106 = scmp.eq.s32.totalorder %s46, 3
      %p107 = por %p105, %p106
      %p109 = scmp.ne.s32.totalorder %s92, %s108
      %p110 = scmp.eq.s32.totalorder %s46, 0
      %p111 = por %p109, %p110
      %s113 = sadd.s32 %s112, 1
      %p116 = scmp.eq.s32.totalorder %s40, 3
      %p117 = scmp.ne.s32.totalorder %s112, %s114
      %p118 = scmp.eq.s32.totalorder %s40, 0
      %p119 = por %p117, %p118
      %p120 = scmp.ne.s32.totalorder %s112, %s114
      %p121 = scmp.eq.s32.totalorder %s45, 3
      %p122 = por %p120, %p121
      %p123 = scmp.ne.s32.totalorder %s114, %s115
      %p124 = scmp.eq.s32.totalorder %s45, 0
      %p125 = por %p123, %p124
      %p126 = scmp.ne.s32.totalorder %s114, %s115
      %p127 = scmp.eq.s32.totalorder %s46, 3
      %p128 = por %p126, %p127
      %p130 = scmp.ne.s32.totalorder %s115, %s129
      %p131 = scmp.eq.s32.totalorder %s46, 0
      %p132 = por %p130, %p131
      %s133 = ssub.s32 %s48, %s55
      %p134 = scmp.eq.s32.totalorder %s133, 0
      %s136 = sadd.s32 %s135, 1
      %s137 = scalar_select %p134, %s135, %s136
      %p140 = pneg %p134
      %p141 = scmp.eq.s32.totalorder %s40, 3
      %p142 = por %p140, %p141
      %p143 = scmp.ne.s32.totalorder %s135, %s138
      %p144 = scmp.eq.s32.totalorder %s40, 0
      %p145 = por %p143, %p144
      %p146 = scmp.ne.s32.totalorder %s135, %s138
      %p147 = scmp.eq.s32.totalorder %s45, 3
      %p148 = por %p146, %p147
      %p149 = scmp.ne.s32.totalorder %s138, %s139
      %p150 = scmp.eq.s32.totalorder %s45, 0
      %p151 = por %p149, %p150
      %p152 = scmp.ne.s32.totalorder %s138, %s139
      %p153 = scmp.eq.s32.totalorder %s46, 3
      %p154 = por %p152, %p153
      %p156 = scmp.ne.s32.totalorder %s139, %s155
      %p157 = scmp.eq.s32.totalorder %s46, 0
      %p158 = por %p156, %p157
      %s159 = ssub.s32 %s48, %s55
      %p160 = scmp.eq.s32.totalorder %s159, 0
      %s162 = sadd.s32 %s161, 1
      %s163 = scalar_select %p160, %s161, %s162
      %p166 = pneg %p160
      %p167 = scmp.eq.s32.totalorder %s40, 3
      %p168 = por %p166, %p167
      %p169 = scmp.ne.s32.totalorder %s161, %s164
      %p170 = scmp.eq.s32.totalorder %s40, 0
      %p171 = por %p169, %p170
      %p172 = scmp.ne.s32.totalorder %s161, %s164
      %p173 = scmp.eq.s32.totalorder %s45, 3
      %p174 = por %p172, %p173
      %p175 = scmp.ne.s32.totalorder %s164, %s165
      %p176 = scmp.eq.s32.totalorder %s45, 0
      %p177 = por %p175, %p176
      %p178 = scmp.ne.s32.totalorder %s164, %s165
      %p179 = scmp.eq.s32.totalorder %s46, 3
      %p180 = por %p178, %p179
      %p182 = scmp.ne.s32.totalorder %s165, %s181
      %p183 = scmp.eq.s32.totalorder %s46, 0
      %p184 = por %p182, %p183
      %s185 = ssub.s32 %s48, %s55
      %p186 = scmp.eq.s32.totalorder %s185, 0
      %s188 = sadd.s32 %s187, 1
      %s189 = scalar_select %p186, %s187, %s188
      %p192 = pneg %p186
      %p193 = scmp.eq.s32.totalorder %s40, 3
      %p194 = por %p192, %p193
      %p195 = scmp.ne.s32.totalorder %s187, %s190
      %p196 = scmp.eq.s32.totalorder %s40, 0
      %p197 = por %p195, %p196
      %p198 = scmp.ne.s32.totalorder %s187, %s190
      %p199 = scmp.eq.s32.totalorder %s45, 3
      %p200 = por %p198, %p199
      %p201 = scmp.ne.s32.totalorder %s190, %s191
      %p202 = scmp.eq.s32.totalorder %s45, 0
      %p203 = por %p201, %p202
      %p204 = scmp.ne.s32.totalorder %s190, %s191
      %p205 = scmp.eq.s32.totalorder %s46, 3
      %p206 = por %p204, %p205
      %p208 = scmp.ne.s32.totalorder %s191, %s207
      %p209 = scmp.eq.s32.totalorder %s46, 0
      %p210 = por %p208, %p209
      %s211 = ssub.s32 %s48, %s55
      %p212 = scmp.eq.s32.totalorder %s211, 0
      %s214 = sadd.s32 %s213, 1
      %s215 = scalar_select %p212, %s213, %s214
      %p218 = pneg %p212
      %p219 = scmp.eq.s32.totalorder %s40, 3
      %p220 = por %p218, %p219
      %p221 = scmp.ne.s32.totalorder %s213, %s216
      %p222 = scmp.eq.s32.totalorder %s40, 0
      %p223 = por %p221, %p222
      %p224 = scmp.ne.s32.totalorder %s213, %s216
      %p225 = scmp.eq.s32.totalorder %s45, 3
      %p226 = por %p224, %p225
      %p227 = scmp.ne.s32.totalorder %s216, %s217
      %p228 = scmp.eq.s32.totalorder %s45, 0
      %p229 = por %p227, %p228
      %p230 = scmp.ne.s32.totalorder %s216, %s217
      %p231 = scmp.eq.s32.totalorder %s46, 3
      %p232 = por %p230, %p231
      %p234 = scmp.ne.s32.totalorder %s217, %s233
      %p235 = scmp.eq.s32.totalorder %s46, 0
      %p236 = por %p234, %p235
      %s237 = ssub.s32 %s48, %s55
      %p238 = scmp.eq.s32.totalorder %s237, 0
      %s240 = sadd.s32 %s239, 1
      %s241 = scalar_select %p238, %s239, %s240
      %p244 = pneg %p238
      %p245 = scmp.eq.s32.totalorder %s40, 3
      %p246 = por %p244, %p245
      %p247 = scmp.ne.s32.totalorder %s239, %s242
      %p248 = scmp.eq.s32.totalorder %s40, 0
      %p249 = por %p247, %p248
      %p250 = scmp.ne.s32.totalorder %s239, %s242
      %p251 = scmp.eq.s32.totalorder %s45, 3
      %p252 = por %p250, %p251
      %p253 = scmp.ne.s32.totalorder %s242, %s243
      %p254 = scmp.eq.s32.totalorder %s45, 0
      %p255 = por %p253, %p254
      %p256 = scmp.ne.s32.totalorder %s242, %s243
      %p257 = scmp.eq.s32.totalorder %s46, 3
      %p258 = por %p256, %p257
      %p260 = scmp.ne.s32.totalorder %s243, %s259
      %p261 = scmp.eq.s32.totalorder %s46, 0
      %p262 = por %p260, %p261
      %s263 = ssub.s32 %s48, %s55
      %p264 = scmp.eq.s32.totalorder %s263, 0
      %s266 = sadd.s32 %s265, 1
      %s267 = scalar_select %p264, %s265, %s266
      %p270 = pneg %p264
      %p271 = scmp.eq.s32.totalorder %s40, 3
      %p272 = por %p270, %p271
      %p273 = scmp.ne.s32.totalorder %s265, %s268
      %p274 = scmp.eq.s32.totalorder %s40, 0
      %p275 = por %p273, %p274
      %p276 = scmp.ne.s32.totalorder %s265, %s268
      %p277 = scmp.eq.s32.totalorder %s45, 3
      %p278 = por %p276, %p277
      %p279 = scmp.ne.s32.totalorder %s268, %s269
      %p280 = scmp.eq.s32.totalorder %s45, 0
      %p281 = por %p279, %p280
      %p282 = scmp.ne.s32.totalorder %s268, %s269
      %p283 = scmp.eq.s32.totalorder %s46, 3
      %p284 = por %p282, %p283
      %p286 = scmp.ne.s32.totalorder %s269, %s285
      %p287 = scmp.eq.s32.totalorder %s46, 0
      %p288 = por %p286, %p287
      %s289 = ssub.s32 %s48, %s55
      %p290 = scmp.eq.s32.totalorder %s289, 0
      %s292 = sadd.s32 %s291, 1
      %s293 = scalar_select %p290, %s291, %s292
      %p296 = pneg %p290
      %p297 = scmp.eq.s32.totalorder %s40, 3
      %p298 = por %p296, %p297
      %p299 = scmp.ne.s32.totalorder %s291, %s294
      %p300 = scmp.eq.s32.totalorder %s40, 0
      %p301 = por %p299, %p300
      %p302 = scmp.ne.s32.totalorder %s291, %s294
      %p303 = scmp.eq.s32.totalorder %s45, 3
      %p304 = por %p302, %p303
      %p305 = scmp.ne.s32.totalorder %s294, %s295
      %p306 = scmp.eq.s32.totalorder %s45, 0
      %p307 = por %p305, %p306
      %p308 = scmp.ne.s32.totalorder %s294, %s295
      %p309 = scmp.eq.s32.totalorder %s46, 3
      %p310 = por %p308, %p309
      %p312 = scmp.ne.s32.totalorder %s295, %s311
      %p313 = scmp.eq.s32.totalorder %s46, 0
      %p314 = por %p312, %p313
      %s316 = sadd.s32 %s315, 1
      %p319 = scmp.eq.s32.totalorder %s40, 3
      %p320 = scmp.ne.s32.totalorder %s315, %s317
      %p321 = scmp.eq.s32.totalorder %s40, 0
      %p322 = por %p320, %p321
      %p323 = scmp.ne.s32.totalorder %s315, %s317
      %p324 = scmp.eq.s32.totalorder %s45, 3
      %p325 = por %p323, %p324
      %p326 = scmp.ne.s32.totalorder %s317, %s318
      %p327 = scmp.eq.s32.totalorder %s45, 0
      %p328 = por %p326, %p327
      %p329 = scmp.ne.s32.totalorder %s317, %s318
      %p330 = scmp.eq.s32.totalorder %s46, 3
      %p331 = por %p329, %p330
      %p333 = scmp.ne.s32.totalorder %s318, %s332
      %p334 = scmp.eq.s32.totalorder %s46, 0
      %p335 = por %p333, %p334
      %s337 = sadd.s32 %s336, 1
      %p340 = scmp.eq.s32.totalorder %s40, 3
      %p341 = scmp.ne.s32.totalorder %s336, %s338
      %p342 = scmp.eq.s32.totalorder %s40, 0
      %p343 = por %p341, %p342
      %p344 = scmp.ne.s32.totalorder %s336, %s338
      %p345 = scmp.eq.s32.totalorder %s45, 3
      %p346 = por %p344, %p345
      %p347 = scmp.ne.s32.totalorder %s338, %s339
      %p348 = scmp.eq.s32.totalorder %s45, 0
      %p349 = por %p347, %p348
      %p350 = scmp.ne.s32.totalorder %s338, %s339
      %p351 = scmp.eq.s32.totalorder %s46, 3
      %p352 = por %p350, %p351
      %p354 = scmp.ne.s32.totalorder %s339, %s353
      %p355 = scmp.eq.s32.totalorder %s46, 0
      %p356 = por %p354, %p355
      %s358 = sadd.s32 %s357, 1
      %p361 = scmp.eq.s32.totalorder %s40, 3
      %p362 = scmp.ne.s32.totalorder %s357, %s359
      %p363 = scmp.eq.s32.totalorder %s40, 0
      %p364 = por %p362, %p363
      %p365 = scmp.ne.s32.totalorder %s357, %s359
      %p366 = scmp.eq.s32.totalorder %s45, 3
      %p367 = por %p365, %p366
      %p368 = scmp.ne.s32.totalorder %s359, %s360
      %p369 = scmp.eq.s32.totalorder %s45, 0
      %p370 = por %p368, %p369
      %p371 = scmp.ne.s32.totalorder %s359, %s360
      %p372 = scmp.eq.s32.totalorder %s46, 3
      %p373 = por %p371, %p372
      %p375 = scmp.ne.s32.totalorder %s360, %s374
      %p376 = scmp.eq.s32.totalorder %s46, 0
      %p377 = por %p375, %p376
      %s379 = sadd.s32 %s378, 1
      %p382 = scmp.eq.s32.totalorder %s40, 3
      %p383 = scmp.ne.s32.totalorder %s378, %s380
      %p384 = scmp.eq.s32.totalorder %s40, 0
      %p385 = por %p383, %p384
      %p386 = scmp.ne.s32.totalorder %s378, %s380
      %p387 = scmp.eq.s32.totalorder %s45, 3
      %p388 = por %p386, %p387
      %p389 = scmp.ne.s32.totalorder %s380, %s381
      %p390 = scmp.eq.s32.totalorder %s45, 0
      %p391 = por %p389, %p390
      %p392 = scmp.ne.s32.totalorder %s380, %s381
      %p393 = scmp.eq.s32.totalorder %s46, 3
      %p394 = por %p392, %p393
      %p396 = scmp.ne.s32.totalorder %s381, %s395
      %p397 = scmp.eq.s32.totalorder %s46, 0
      %p398 = por %p396, %p397
      %s400 = sadd.s32 %s399, 1
      %p403 = scmp.eq.s32.totalorder %s40, 3
      %p404 = scmp.ne.s32.totalorder %s399, %s401
      %p405 = scmp.eq.s32.totalorder %s40, 0
      %p406 = por %p404, %p405
      %p407 = scmp.ne.s32.totalorder %s399, %s401
      %p408 = scmp.eq.s32.totalorder %s45, 3
      %p409 = por %p407, %p408
      %p410 = scmp.ne.s32.totalorder %s401, %s402
      %p411 = scmp.eq.s32.totalorder %s45, 0
      %p412 = por %p410, %p411
      %p413 = scmp.ne.s32.totalorder %s401, %s402
      %p414 = scmp.eq.s32.totalorder %s46, 3
      %p415 = por %p413, %p414
      %p417 = scmp.ne.s32.totalorder %s402, %s416
      %p418 = scmp.eq.s32.totalorder %s46, 0
      %p419 = por %p417, %p418
      %s421 = sadd.s32 %s420, 1
      %p424 = scmp.eq.s32.totalorder %s40, 3
      %p425 = scmp.ne.s32.totalorder %s420, %s422
      %p426 = scmp.eq.s32.totalorder %s40, 0
      %p427 = por %p425, %p426
      %p428 = scmp.ne.s32.totalorder %s420, %s422
      %p429 = scmp.eq.s32.totalorder %s45, 3
      %p430 = por %p428, %p429
      %p431 = scmp.ne.s32.totalorder %s422, %s423
      %p432 = scmp.eq.s32.totalorder %s45, 0
      %p433 = por %p431, %p432
      %p434 = scmp.ne.s32.totalorder %s422, %s423
      %p435 = scmp.eq.s32.totalorder %s46, 3
      %p436 = por %p434, %p435
      %p438 = scmp.ne.s32.totalorder %s423, %s437
      %p439 = scmp.eq.s32.totalorder %s46, 0
      %p440 = por %p438, %p439
      %s441 = ssub.s32 %s47, %s59
      %p442 = scmp.eq.s32.totalorder %s441, 0
      %s444 = sadd.s32 %s443, 1
      %s445 = scalar_select %p442, %s443, %s444
      %p448 = pneg %p442
      %p449 = scmp.eq.s32.totalorder %s40, 3
      %p450 = por %p448, %p449
      %p451 = scmp.ne.s32.totalorder %s443, %s446
      %p452 = scmp.eq.s32.totalorder %s40, 0
      %p453 = por %p451, %p452
      %p454 = scmp.ne.s32.totalorder %s443, %s446
      %p455 = scmp.eq.s32.totalorder %s45, 3
      %p456 = por %p454, %p455
      %p457 = scmp.ne.s32.totalorder %s446, %s447
      %p458 = scmp.eq.s32.totalorder %s45, 0
      %p459 = por %p457, %p458
      %p460 = scmp.ne.s32.totalorder %s446, %s447
      %p461 = scmp.eq.s32.totalorder %s46, 3
      %p462 = por %p460, %p461
      %p464 = scmp.ne.s32.totalorder %s447, %s463
      %p465 = scmp.eq.s32.totalorder %s46, 0
      %p466 = por %p464, %p465
      %s467 = ssub.s32 %s47, %s59
      %p468 = scmp.eq.s32.totalorder %s467, 0
      %s470 = sadd.s32 %s469, 1
      %s471 = scalar_select %p468, %s469, %s470
      %p474 = pneg %p468
      %p475 = scmp.eq.s32.totalorder %s40, 3
      %p476 = por %p474, %p475
      %p477 = scmp.ne.s32.totalorder %s469, %s472
      %p478 = scmp.eq.s32.totalorder %s40, 0
      %p479 = por %p477, %p478
      %p480 = scmp.ne.s32.totalorder %s469, %s472
      %p481 = scmp.eq.s32.totalorder %s45, 3
      %p482 = por %p480, %p481
      %p483 = scmp.ne.s32.totalorder %s472, %s473
      %p484 = scmp.eq.s32.totalorder %s45, 0
      %p485 = por %p483, %p484
      %p486 = scmp.ne.s32.totalorder %s472, %s473
      %p487 = scmp.eq.s32.totalorder %s46, 3
      %p488 = por %p486, %p487
      %p490 = scmp.ne.s32.totalorder %s473, %s489
      %p491 = scmp.eq.s32.totalorder %s46, 0
      %p492 = por %p490, %p491
      %s493 = ssub.s32 %s47, %s59
      %p494 = scmp.eq.s32.totalorder %s493, 0
      %s496 = sadd.s32 %s495, 1
      %s497 = scalar_select %p494, %s495, %s496
      %p500 = pneg %p494
      %p501 = scmp.eq.s32.totalorder %s40, 3
      %p502 = por %p500, %p501
      %p503 = scmp.ne.s32.totalorder %s495, %s498
      %p504 = scmp.eq.s32.totalorder %s40, 0
      %p505 = por %p503, %p504
      %p506 = scmp.ne.s32.totalorder %s495, %s498
      %p507 = scmp.eq.s32.totalorder %s45, 3
      %p508 = por %p506, %p507
      %p509 = scmp.ne.s32.totalorder %s498, %s499
      %p510 = scmp.eq.s32.totalorder %s45, 0
      %p511 = por %p509, %p510
      %p512 = scmp.ne.s32.totalorder %s498, %s499
      %p513 = scmp.eq.s32.totalorder %s46, 3
      %p514 = por %p512, %p513
      %p516 = scmp.ne.s32.totalorder %s499, %s515
      %p517 = scmp.eq.s32.totalorder %s46, 0
      %p518 = por %p516, %p517
      %p519 = scmp.le.s32.totalorder 1, %s40
      %p520 = scmp.lt.s32.totalorder %s40, 5
      %p521 = pnand %p519, %p520
      %p522 = pneg %p521
      // Predicated region
      $region9: #{tpu_custom_call.1} parent=5 // pred_check
        _
      $region10: #{tpu_custom_call.1} parent=5 // pred_check_branch
        %524 = sbr.rel (%p521) target = $region12
      $region11: #{tpu_custom_call.1} parent=5 // pred_region
        %s525 = ssub.s32 %s40, 1
        // Predicated region
        $region13: #{tpu_custom_call.1} parent=11 // pred_check
          %p526 = pneg %p125
        $region14: #{tpu_custom_call.1} parent=11 // pred_check_branch
          %528 = sbr.rel (%p526) target = $region16
        $region15: #{tpu_custom_call.1} parent=11 // pred_region
          %s530 = ssub.s32 32, 32
          %531 = vsyncadd [#allocation7], %s530
          %s533 = sshll.u32 [#allocation8], 4
          %s534 = int_to_ptr.vmem [resolvable:$true] %s533
          %536 = dma.hbm_to_vmem [thread:$0]  %s2, 32, %s534, [#allocation7]
        $region16: #{tpu_custom_call.1} parent=11 // pred_fallthru
          _
        // Predicated region
        $region17: #{tpu_custom_call.1} parent=11 // pred_check
          %p537 = pneg %p328
        $region18: #{tpu_custom_call.1} parent=11 // pred_check_branch
          %539 = sbr.rel (%p537) target = $region20
        $region19: #{tpu_custom_call.1} parent=11 // pred_region
          _
        $region20: #{tpu_custom_call.1} parent=11 // pred_fallthru
          _
        // Predicated region
        $region21: #{tpu_custom_call.1} parent=11 // pred_check
          %p540 = pneg %p349
        $region22: #{tpu_custom_call.1} parent=11 // pred_check_branch
          %542 = sbr.rel (%p540) target = $region24
        $region23: #{tpu_custom_call.1} parent=11 // pred_region
          _
        $region24: #{tpu_custom_call.1} parent=11 // pred_fallthru
          _
        // Predicated region
        $region25: #{tpu_custom_call.1} parent=11 // pred_check
          %p543 = pneg %p370
        $region26: #{tpu_custom_call.1} parent=11 // pred_check_branch
          %545 = sbr.rel (%p543) target = $region28
        $region27: #{tpu_custom_call.1} parent=11 // pred_region
          _
        $region28: #{tpu_custom_call.1} parent=11 // pred_fallthru
          _
        // Predicated region
        $region29: #{tpu_custom_call.1} parent=11 // pred_check
          %p546 = pneg %p391
        $region30: #{tpu_custom_call.1} parent=11 // pred_check_branch
          %548 = sbr.rel (%p546) target = $region32
        $region31: #{tpu_custom_call.1} parent=11 // pred_region
          _
        $region32: #{tpu_custom_call.1} parent=11 // pred_fallthru
          _
        // Predicated region
        $region33: #{tpu_custom_call.1} parent=11 // pred_check
          %p549 = pneg %p412
        $region34: #{tpu_custom_call.1} parent=11 // pred_check_branch
          %551 = sbr.rel (%p549) target = $region36
        $region35: #{tpu_custom_call.1} parent=11 // pred_region
          _
        $region36: #{tpu_custom_call.1} parent=11 // pred_fallthru
          _
        // Predicated region
        $region37: #{tpu_custom_call.1} parent=11 // pred_check
          %p552 = pneg %p433
        $region38: #{tpu_custom_call.1} parent=11 // pred_check_branch
          %554 = sbr.rel (%p552) target = $region40
        $region39: #{tpu_custom_call.1} parent=11 // pred_region
          _
        $region40: #{tpu_custom_call.1} parent=11 // pred_fallthru
          _
      $region12: #{tpu_custom_call.1} parent=5 // pred_fallthru
        _
      %p555 = scmp.lt.s32.totalorder %s40, 4
      // Predicated region
      $region41: #{tpu_custom_call.1} parent=5 // pred_check
        %p556 = pneg %p555
      $region42: #{tpu_custom_call.1} parent=5 // pred_check_branch
        %558 = sbr.rel (%p556) target = $region44
      $region43: #{tpu_custom_call.1} parent=5 // pred_region
        // Predicated region
        $region45: #{tpu_custom_call.1} parent=43 // pred_check
          %p559 = pneg %p72
        $region46: #{tpu_custom_call.1} parent=43 // pred_check_branch
          %561 = sbr.rel (%p559) target = $region48
        $region47: #{tpu_custom_call.1} parent=43 // pred_region
          %s562 = sand.u32 %s62, 1
          %s563 = scalar_lea.sflag [#allocation4], %s562
          %s564 = sand.u32 %s62, 1
          %s565 = smul.addr %s564, 8
          %s566 = scalar_lea.vmem [#allocation3], %s565
          %s568 = ssub.s32 128, 128
          %569 = vsyncadd %s563, %s568
          %s570 = smul.addr %s47, 128
          %s571 = scalar_lea.hbm %s0, %s570
          %s573 = sshll.u32 %s566, 4
          %s574 = int_to_ptr.vmem [resolvable:$true] %s573
          %576 = dma.hbm_to_vmem [thread:$0]  %s571, 128, %s574, %s563
        $region48: #{tpu_custom_call.1} parent=43 // pred_fallthru
          _
        // Predicated region
        $region49: #{tpu_custom_call.1} parent=43 // pred_check
          %p577 = pneg %p98
        $region50: #{tpu_custom_call.1} parent=43 // pred_check_branch
          %579 = sbr.rel (%p577) target = $region52
        $region51: #{tpu_custom_call.1} parent=43 // pred_region
          %s580 = sand.u32 %s40, 1
          %s581 = scalar_lea.sflag [#allocation7], %s580
          %s582 = sand.u32 %s88, 1
          %s583 = scalar_lea.vmem [#allocation6], %s582
          %s585 = ssub.s32 16, 16
          %586 = vsyncadd %s581, %s585
          %s587 = smul.addr %s47, 16
          %s588 = scalar_lea.hbm %s1, %s587
          %s590 = sshll.u32 %s583, 4
          %s591 = int_to_ptr.vmem [resolvable:$true] %s590
          %593 = dma.hbm_to_vmem [thread:$0]  %s588, 16, %s591, %s581
        $region52: #{tpu_custom_call.1} parent=43 // pred_fallthru
          _
        // Predicated region
        $region53: #{tpu_custom_call.1} parent=43 // pred_check
          %p594 = pneg %p145
        $region54: #{tpu_custom_call.1} parent=43 // pred_check_branch
          %596 = sbr.rel (%p594) target = $region56
        $region55: #{tpu_custom_call.1} parent=43 // pred_region
          %p597 = scmp.lt.s32.totalorder %s48, 1
          %s598 = scalar_select %p597, %s48, 1
          %s599 = smul.addr %s598, 4
          %s600 = smul.addr %s599, 4
          %s601 = scalar_lea.vmem %s3, %s600
        $region56: #{tpu_custom_call.1} parent=43 // pred_fallthru
          _
        // Predicated region
        $region57: #{tpu_custom_call.1} parent=43 // pred_check
          %p602 = pneg %p171
        $region58: #{tpu_custom_call.1} parent=43 // pred_check_branch
          %604 = sbr.rel (%p602) target = $region60
        $region59: #{tpu_custom_call.1} parent=43 // pred_region
          %s605 = sand.u32 %s40, 1
          %s606 = scalar_lea.sflag [#allocation10], %s605
          %s607 = sand.u32 %s161, 1
          %s608 = scalar_lea.vmem [#allocation9], %s607
          %s610 = ssub.s32 16, 16
          %611 = vsyncadd %s606, %s610
          %s612 = smul.addr %s48, 16
          %s613 = scalar_lea.hbm %s4, %s612
          %s615 = sshll.u32 %s608, 4
          %s616 = int_to_ptr.vmem [resolvable:$true] %s615
          %618 = dma.hbm_to_vmem [thread:$0]  %s613, 16, %s616, %s606
        $region60: #{tpu_custom_call.1} parent=43 // pred_fallthru
          _
        // Predicated region
        $region61: #{tpu_custom_call.1} parent=43 // pred_check
          %p619 = pneg %p197
        $region62: #{tpu_custom_call.1} parent=43 // pred_check_branch
          %621 = sbr.rel (%p619) target = $region64
        $region63: #{tpu_custom_call.1} parent=43 // pred_region
          %p622 = scmp.lt.s32.totalorder %s48, 1
          %s623 = scalar_select %p622, %s48, 1
          %s624 = smul.addr %s623, 4
          %s625 = smul.addr %s624, 4
          %s626 = scalar_lea.vmem %s5, %s625
        $region64: #{tpu_custom_call.1} parent=43 // pred_fallthru
          _
        // Predicated region
        $region65: #{tpu_custom_call.1} parent=43 // pred_check
          %p627 = pneg %p223
        $region66: #{tpu_custom_call.1} parent=43 // pred_check_branch
          %629 = sbr.rel (%p627) target = $region68
        $region67: #{tpu_custom_call.1} parent=43 // pred_region
          %p630 = scmp.lt.s32.totalorder %s48, 1
          %s631 = scalar_select %p630, %s48, 1
          %s632 = smul.addr %s631, 4
          %s633 = smul.addr %s632, 4
          %s634 = scalar_lea.vmem %s6, %s633
        $region68: #{tpu_custom_call.1} parent=43 // pred_fallthru
          _
        // Predicated region
        $region69: #{tpu_custom_call.1} parent=43 // pred_check
          %p635 = pneg %p249
        $region70: #{tpu_custom_call.1} parent=43 // pred_check_branch
          %637 = sbr.rel (%p635) target = $region72
        $region71: #{tpu_custom_call.1} parent=43 // pred_region
          %s638 = sand.u32 %s40, 1
          %s639 = scalar_lea.sflag [#allocation10], %s638
          %s640 = sand.u32 %s239, 1
          %s641 = scalar_lea.vmem [#allocation11], %s640
          %s643 = ssub.s32 16, 16
          %644 = vsyncadd %s639, %s643
          %s645 = smul.addr %s48, 16
          %s646 = scalar_lea.hbm %s7, %s645
          %s648 = sshll.u32 %s641, 4
          %s649 = int_to_ptr.vmem [resolvable:$true] %s648
          %651 = dma.hbm_to_vmem [thread:$0]  %s646, 16, %s649, %s639
        $region72: #{tpu_custom_call.1} parent=43 // pred_fallthru
          _
        // Predicated region
        $region73: #{tpu_custom_call.1} parent=43 // pred_check
          %p652 = pneg %p275
        $region74: #{tpu_custom_call.1} parent=43 // pred_check_branch
          %654 = sbr.rel (%p652) target = $region76
        $region75: #{tpu_custom_call.1} parent=43 // pred_region
          %p655 = scmp.lt.s32.totalorder %s48, 1
          %s656 = scalar_select %p655, %s48, 1
          %s657 = smul.addr %s656, 8
          %s658 = smul.addr %s657, 4
          %s659 = scalar_lea.vmem %s8, %s658
        $region76: #{tpu_custom_call.1} parent=43 // pred_fallthru
          _
        // Predicated region
        $region77: #{tpu_custom_call.1} parent=43 // pred_check
          %p660 = pneg %p301
        $region78: #{tpu_custom_call.1} parent=43 // pred_check_branch
          %662 = sbr.rel (%p660) target = $region80
        $region79: #{tpu_custom_call.1} parent=43 // pred_region
          %p663 = scmp.lt.s32.totalorder %s48, 1
          %s664 = scalar_select %p663, %s48, 1
          %s665 = smul.addr %s664, 8
          %s666 = scalar_lea.vmem %s9, %s665
        $region80: #{tpu_custom_call.1} parent=43 // pred_fallthru
          _
      $region44: #{tpu_custom_call.1} parent=5 // pred_fallthru
        _
      %p667 = scmp.le.s32.totalorder 1, %s40
      %p668 = scmp.lt.s32.totalorder %s40, 5
      %p669 = pnand %p667, %p668
      %p670 = pneg %p669
      // Predicated region
      $region81: #{tpu_custom_call.1} parent=5 // pred_check
        _
      $region82: #{tpu_custom_call.1} parent=5 // pred_check_branch
        %672 = sbr.rel (%p669) target = $region84
      $region83: #{tpu_custom_call.1} parent=5 // pred_region
        %s673 = ssub.s32 %s40, 1
        %s674 = sand.u32 %s65, 1
        %s675 = scalar_lea.sflag [#allocation4], %s674
        %s676 = sand.u32 %s65, 1
        %s677 = smul.addr %s676, 8
        %s678 = scalar_lea.vmem [#allocation3], %s677
        // Predicated region
        $region85: #{tpu_custom_call.1} parent=83 // pred_check
          %p679 = pneg %p78
        $region86: #{tpu_custom_call.1} parent=83 // pred_check_branch
          %681 = sbr.rel (%p679) target = $region88
        $region87: #{tpu_custom_call.1} parent=83 // pred_region
          %682 = dma.done %s675, 128
        $region88: #{tpu_custom_call.1} parent=83 // pred_fallthru
          _
        %s683 = sand.u32 %s45, 1
        %s684 = scalar_lea.sflag [#allocation7], %s683
        %s685 = sand.u32 %s91, 1
        %s686 = scalar_lea.vmem [#allocation6], %s685
        // Predicated region
        $region89: #{tpu_custom_call.1} parent=83 // pred_check
          %p687 = pneg %p104
        $region90: #{tpu_custom_call.1} parent=83 // pred_check_branch
          %689 = sbr.rel (%p687) target = $region92
        $region91: #{tpu_custom_call.1} parent=83 // pred_region
          %690 = dma.done %s684, 16
        $region92: #{tpu_custom_call.1} parent=83 // pred_fallthru
          _
        // Predicated region
        $region93: #{tpu_custom_call.1} parent=83 // pred_check
          %p691 = pneg %p125
        $region94: #{tpu_custom_call.1} parent=83 // pred_check_branch
          %693 = sbr.rel (%p691) target = $region96
        $region95: #{tpu_custom_call.1} parent=83 // pred_region
          %694 = dma.done [#allocation7], 32
        $region96: #{tpu_custom_call.1} parent=83 // pred_fallthru
          _
        %s695 = sand.u32 %s45, 1
        %s696 = scalar_lea.sflag [#allocation10], %s695
        %s697 = sand.u32 %s164, 1
        %s698 = scalar_lea.vmem [#allocation9], %s697
        // Predicated region
        $region97: #{tpu_custom_call.1} parent=83 // pred_check
          %p699 = pneg %p177
        $region98: #{tpu_custom_call.1} parent=83 // pred_check_branch
          %701 = sbr.rel (%p699) target = $region100
        $region99: #{tpu_custom_call.1} parent=83 // pred_region
          %702 = dma.done %s696, 16
        $region100: #{tpu_custom_call.1} parent=83 // pred_fallthru
          _
        %s703 = sand.u32 %s45, 1
        %s704 = scalar_lea.sflag [#allocation10], %s703
        %s705 = sand.u32 %s242, 1
        %s706 = scalar_lea.vmem [#allocation11], %s705
        // Predicated region
        $region101: #{tpu_custom_call.1} parent=83 // pred_check
          %p707 = pneg %p255
        $region102: #{tpu_custom_call.1} parent=83 // pred_check_branch
          %709 = sbr.rel (%p707) target = $region104
        $region103: #{tpu_custom_call.1} parent=83 // pred_region
          %710 = dma.done %s704, 16
        $region104: #{tpu_custom_call.1} parent=83 // pred_fallthru
          _
        %s711 = sand.u32 %s65, 1
        %s712 = scalar_lea.sflag [#allocation4], %s711
        %s713 = sand.u32 %s65, 1
        %s714 = smul.addr %s713, 8
        %s715 = scalar_lea.vmem [#allocation3], %s714
        %p716 = pneg %p78
        %p717 = pneg %p75
        %s718 = sand.u32 %s45, 1
        %s719 = scalar_lea.sflag [#allocation7], %s718
        %s720 = sand.u32 %s91, 1
        %s721 = scalar_lea.vmem [#allocation6], %s720
        %p722 = pneg %p104
        %p723 = pneg %p101
        %p724 = pneg %p125
        %p725 = pneg %p122
        %p726 = scmp.lt.s32.totalorder %s50, 1
        %s727 = scalar_select %p726, %s50, 1
        %s728 = smul.addr %s727, 4
        %s729 = smul.addr %s728, 4
        %s730 = scalar_lea.vmem %s3, %s729
        %p731 = pneg %p151
        %p732 = pneg %p148
        %s733 = sand.u32 %s45, 1
        %s734 = scalar_lea.sflag [#allocation10], %s733
        %s735 = sand.u32 %s164, 1
        %s736 = scalar_lea.vmem [#allocation9], %s735
        %p737 = pneg %p177
        %p738 = pneg %p174
        %p739 = scmp.lt.s32.totalorder %s50, 1
        %s740 = scalar_select %p739, %s50, 1
        %s741 = smul.addr %s740, 4
        %s742 = smul.addr %s741, 4
        %s743 = scalar_lea.vmem %s5, %s742
        %p744 = pneg %p203
        %p745 = pneg %p200
        %p746 = scmp.lt.s32.totalorder %s50, 1
        %s747 = scalar_select %p746, %s50, 1
        %s748 = smul.addr %s747, 4
        %s749 = smul.addr %s748, 4
        %s750 = scalar_lea.vmem %s6, %s749
        %p751 = pneg %p229
        %p752 = pneg %p226
        %s753 = sand.u32 %s45, 1
        %s754 = scalar_lea.sflag [#allocation10], %s753
        %s755 = sand.u32 %s242, 1
        %s756 = scalar_lea.vmem [#allocation11], %s755
        %p757 = pneg %p255
        %p758 = pneg %p252
        %p759 = scmp.lt.s32.totalorder %s50, 1
        %s760 = scalar_select %p759, %s50, 1
        %s761 = smul.addr %s760, 8
        %s762 = smul.addr %s761, 4
        %s763 = scalar_lea.vmem %s8, %s762
        %p764 = pneg %p281
        %p765 = pneg %p278
        %p766 = scmp.lt.s32.totalorder %s50, 1
        %s767 = scalar_select %p766, %s50, 1
        %s768 = smul.addr %s767, 8
        %s769 = scalar_lea.vmem %s9, %s768
        %p770 = pneg %p307
        %p771 = pneg %p304
        %p772 = pneg %p328
        %p773 = pneg %p325
        %p774 = pneg %p349
        %p775 = pneg %p346
        %p776 = pneg %p370
        %p777 = pneg %p367
        %p778 = pneg %p391
        %p779 = pneg %p388
        %p780 = pneg %p412
        %p781 = pneg %p409
        %p782 = pneg %p433
        %p783 = pneg %p430
        %p784 = pneg %p459
        %p785 = pneg %p456
        %s786 = sand.u32 %s446, 1
        %s787 = scalar_lea.sflag [#allocation5], %s786
        %s788 = sand.u32 %s446, 1
        %s789 = smul.addr %s788, 8
        %s790 = scalar_lea.vmem [#allocation12], %s789
        %p791 = pneg %p485
        %p792 = pneg %p482
        %s793 = sand.u32 %s45, 1
        %s794 = scalar_lea.sflag [#allocation14], %s793
        %s795 = sand.u32 %s472, 1
        %s796 = smul.addr %s795, 8
        %s797 = scalar_lea.vmem [#allocation13], %s796
        %p798 = pneg %p511
        %p799 = pneg %p508
        %s800 = sand.u32 %s45, 1
        %s801 = scalar_lea.sflag [#allocation14], %s800
        %s802 = sand.u32 %s498, 1
        %s803 = scalar_lea.vmem [#allocation15], %s802
        %p804 = scmp.lt.s32.totalorder %s50, 1
        %s805 = scalar_select %p804, %s50, 1
        %s806 = smul.addr %s805, 4
        %s807 = smul.addr %s806, 4
        %s808 = scalar_lea.vmem %s3, %s807
        %p809 = scmp.lt.s32.totalorder %s50, 1
        %s810 = scalar_select %p809, %s50, 1
        %s811 = smul.addr %s810, 4
        %s812 = smul.addr %s811, 4
        %s813 = scalar_lea.vmem %s5, %s812
        %p814 = scmp.lt.s32.totalorder %s50, 1
        %s815 = scalar_select %p814, %s50, 1
        %s816 = smul.addr %s815, 4
        %s817 = smul.addr %s816, 4
        %s818 = scalar_lea.vmem %s6, %s817
        %p819 = scmp.lt.s32.totalorder %s50, 1
        %s820 = scalar_select %p819, %s50, 1
        %s821 = smul.addr %s820, 8
        %s822 = smul.addr %s821, 4
        %s823 = scalar_lea.vmem %s8, %s822
        %p824 = scmp.lt.s32.totalorder %s50, 1
        %s825 = scalar_select %p824, %s50, 1
        %s826 = smul.addr %s825, 8
        %s827 = scalar_lea.vmem %s9, %s826
        %p829 = scmp.eq.s32.totalorder %s50, 0
        // Predicated region
        $region105: #{tpu_custom_call.1} parent=83 // pred_check
          %p830 = pneg %p829
        $region106: #{tpu_custom_call.1} parent=83 // pred_check_branch
          %832 = sbr.rel (%p830) target = $region108
        $region107: #{tpu_custom_call.1} parent=83 // pred_region
          %v833 = vld [vmem:[%s678] sm:$0xff]
          %v834 = vld [vmem:[#allocation8] sm:$0x1]
          %v835 = vld [vmem:[#allocation8 + $0x1] sm:$0x1]
          %vm836 = vcmask 261120
          %v837 = vsel %vm836, %v833, 0.0
          %838 = vadd.xlane.f32.xlu0 %v837
          %v839 = vpop.xlane.xlu0 %838
          %v840 = vrcp.pop 32.0
          %v841 = vmul.f32 %v839, %v840
          %v842 = vsub.f32 %v833, %v841
          %v843 = vmul.f32 %v842, %v842
          %v844 = vsel %vm836, %v843, 0.0
          %845 = vadd.xlane.f32.xlu0 %v844
          %v846 = vpop.xlane.xlu0 %845
          %v847 = vmul.f32 %v846, %v840
          %v848 = vadd.f32 %v847, 1e-12
          %v849 = vrsqrt.pop %v848
          %v850 = vmul.f32 %v842, %v849
          %v851 = vlaneseq
          %v852 = vshrl.u32 %v851, 7
          %v853 = vsub.s32 0, %v852
          %v854 = vrot.slane %v834, %v853
          %v855 = vmul.f32 %v850, %v854
          %v856 = vlaneseq
          %v857 = vshrl.u32 %v856, 7
          %v858 = vsub.s32 0, %v857
          %v859 = vrot.slane %v835, %v858
          %v860 = vadd.f32 %v855, %v859
          %861 = vst.msk [vmem:[#allocation2] sm:$0xff] %vm836, %v860
        $region108: #{tpu_custom_call.1} parent=83 // pred_fallthru
          _
        %v862 = vld [vmem:[#allocation2] sm:$0xff]
        %v863 = vpack.c.bf16 %v862, %v862
        %v864 = vld [vmem:[%s808] sm:$0xf]
        %v865 = vld [vmem:[%s808 + $0x4] sm:$0xf]
        %v866 = vld [vmem:[%s808 + $0x8] sm:$0xf]
        %v867 = vld [vmem:[%s808 + $0xc] sm:$0xf]
        %v868 = vld [vmem:[%s698] sm:$0x1]
        %v870 = vlaneseq
        %v871 = vshrl.u32 %v870, 7
        %v872 = vsub.s32 0, %v871
        %v873 = vrot.slane %v868, %v872
        %v879 = vunpack.c.l.b16 %v864
        %v880 = vunpack.c.l.b16 %v865
        %v881 = vunpack.c.l.b16 %v866
        %v882 = vunpack.c.l.b16 %v867
        %v883 = vpack.c.b16 %v880, %v879
        %v884 = vpack.c.b16 %v882, %v881
        %vm887 = vcmask 261120
        %v889 = vsel %vm887, %v863, 0
        %891 = vmatprep.subr.bf16.mxu0 0
        %892 = vmatpush1.bf16.msra.mxu0 %v883
        %893 = vmatprep.subr.bf16.mxu0 0
        %894 = vmatpush1.bf16.msra.mxu0 %v884
        %895 = vmatprep.subr.bf16.mxu0 0
        %896 = vmatpush1.bf16.msra.mxu0 0
        %897 = vmatprep.subr.bf16.mxu0 0
        %898 = vmatpush1.bf16.msra.mxu0 0
        %899 = vmatprep.subr.bf16.mxu0 0
        %900 = vmatpush1.bf16.msra.mxu0 0
        %901 = vmatprep.subr.bf16.mxu0 0
        %902 = vmatpush1.bf16.msra.mxu0 0
        %903 = vmatprep.subr.bf16.mxu0 0
        %904 = vmatpush1.bf16.msra.mxu0 0
        %905 = vmatprep.subr.bf16.mxu0 0
        %906 = vmatpush1.bf16.msra.mxu0 0
        %907 = vmatprep.subr.bf16.mxu0 0
        %908 = vmatpush1.bf16.msra.mxu0 0
        %909 = vmatprep.subr.bf16.mxu0 0
        %910 = vmatpush1.bf16.msra.mxu0 0
        %911 = vmatprep.subr.bf16.mxu0 0
        %912 = vmatpush1.bf16.msra.mxu0 0
        %913 = vmatprep.subr.bf16.mxu0 0
        %914 = vmatpush1.bf16.msra.mxu0 0
        %915 = vmatprep.subr.bf16.mxu0 0
        %916 = vmatpush1.bf16.msra.mxu0 0
        %917 = vmatprep.subr.bf16.mxu0 0
        %918 = vmatpush1.bf16.msra.mxu0 0
        %919 = vmatprep.subr.bf16.mxu0 0
        %920 = vmatpush1.bf16.msra.mxu0 0
        %921 = vmatprep.subr.bf16.mxu0 0
        %922 = vmatpush1.bf16.msra.mxu0 0
        %923 = vmatprep.mubr.bf16.mxu0 0
        %924 = vmatmul.mubr.bf16.gmra.mrb[0].mxu0 %v889
        %v925 = vpop.f32.mrb[0].mxu0
        %v926 = vadd.f32 %v873, %v925
        %v927 = vpop.f32.mrb[0].mxu0
        %v928 = vpop.f32.mrb[0].mxu0
        %v929 = vpop.f32.mrb[0].mxu0
        %930 = vdwg.mxu0
        %932 = vrot.lane.b32.xlu0 %v926, 120
        %v933 = vpop.permute.xlu0 %932
        %935 = vrot.lane.b32.xlu0 %v926, 112
        %v936 = vpop.permute.xlu0 %935
        %938 = vrot.lane.b32.xlu0 %v926, 104
        %v939 = vpop.permute.xlu0 %938
        %v941 = vpack.c.bf16 %v926, %v926
        %v942 = vpack.c.bf16 %v933, %v933
        %v943 = vpack.c.bf16 %v936, %v936
        %v944 = vpack.c.bf16 %v939, %v939
        %946 = vrot.lane.b32.xlu0 %v941, 96
        %v947 = vpop.permute.xlu0 %946
        %vm948 = vcmask 64512
        %v950 = vsel %vm948, %v941, 0
        %v953 = vsel %vm948, %v947, 0
        %955 = vmatprep.subr.bf16.mxu0 0
        %956 = vmatpush1.bf16.xpose.msra.mxu0 %v953
        %957 = vmatprep.subr.bf16.mxu0 0
        %958 = vmatpush1.bf16.xpose.msra.mxu0 0
        %959 = vmatprep.subr.bf16.mxu0 0
        %960 = vmatpush1.bf16.xpose.msra.mxu0 0
        %961 = vmatprep.subr.bf16.mxu0 0
        %962 = vmatpush1.bf16.xpose.msra.mxu0 0
        %963 = vmatprep.subr.bf16.mxu0 0
        %964 = vmatpush1.bf16.xpose.msra.mxu0 0
        %965 = vmatprep.subr.bf16.mxu0 0
        %966 = vmatpush1.bf16.xpose.msra.mxu0 0
        %967 = vmatprep.subr.bf16.mxu0 0
        %968 = vmatpush1.bf16.xpose.msra.mxu0 0
        %969 = vmatprep.subr.bf16.mxu0 0
        %970 = vmatpush1.bf16.xpose.msra.mxu0 0
        %971 = vmatprep.subr.bf16.mxu0 0
        %972 = vmatpush1.bf16.xpose.msra.mxu0 0
        %973 = vmatprep.subr.bf16.mxu0 0
        %974 = vmatpush1.bf16.xpose.msra.mxu0 0
        %975 = vmatprep.subr.bf16.mxu0 0
        %976 = vmatpush1.bf16.xpose.msra.mxu0 0
        %977 = vmatprep.subr.bf16.mxu0 0
        %978 = vmatpush1.bf16.xpose.msra.mxu0 0
        %979 = vmatprep.subr.bf16.mxu0 0
        %980 = vmatpush1.bf16.xpose.msra.mxu0 0
        %981 = vmatprep.subr.bf16.mxu0 0
        %982 = vmatpush1.bf16.xpose.msra.mxu0 0
        %983 = vmatprep.subr.bf16.mxu0 0
        %984 = vmatpush1.bf16.xpose.msra.mxu0 0
        %985 = vmatprep.subr.bf16.mxu0 0
        %986 = vmatpush1.bf16.xpose.msra.mxu0 0
        %987 = vmatprep.mubr.bf16.mxu0 0
        %988 = vmatmul.mubr.bf16.gmra.mrb[0].mxu0 %v950
        %v989 = vpop.f32.mrb[0].mxu0
        %v990 = vadd.f32 0.0, %v989
        %v991 = vpop.f32.mrb[0].mxu0
        %v992 = vpop.f32.mrb[0].mxu0
        %v993 = vpop.f32.mrb[0].mxu0
        %994 = vdwg.mxu0
        %996 = vrot.lane.b32.xlu0 %v942, 96
        %v997 = vpop.permute.xlu0 %996
        %v999 = vsel %vm948, %v942, 0
        %v1002 = vsel %vm948, %v997, 0
        %1004 = vmatprep.subr.bf16.mxu0 0
        %1005 = vmatpush1.bf16.xpose.msra.mxu0 %v1002
        %1006 = vmatprep.subr.bf16.mxu0 0
        %1007 = vmatpush1.bf16.xpose.msra.mxu0 0
        %1008 = vmatprep.subr.bf16.mxu0 0
        %1009 = vmatpush1.bf16.xpose.msra.mxu0 0
        %1010 = vmatprep.subr.bf16.mxu0 0
        %1011 = vmatpush1.bf16.xpose.msra.mxu0 0
        %1012 = vmatprep.subr.bf16.mxu0 0
        %1013 = vmatpush1.bf16.xpose.msra.mxu0 0
        %1014 = vmatprep.subr.bf16.mxu0 0
        %1015 = vmatpush1.bf16.xpose.msra.mxu0 0
        %1016 = vmatprep.subr.bf16.mxu0 0
        %1017 = vmatpush1.bf16.xpose.msra.mxu0 0
        %1018 = vmatprep.subr.bf16.mxu0 0
        %1019 = vmatpush1.bf16.xpose.msra.mxu0 0
        %1020 = vmatprep.subr.bf16.mxu0 0
        %1021 = vmatpush1.bf16.xpose.msra.mxu0 0
        %1022 = vmatprep.subr.bf16.mxu0 0
        %1023 = vmatpush1.bf16.xpose.msra.mxu0 0
        %1024 = vmatprep.subr.bf16.mxu0 0
        %1025 = vmatpush1.bf16.xpose.msra.mxu0 0
        %1026 = vmatprep.subr.bf16.mxu0 0
        %1027 = vmatpush1.bf16.xpose.msra.mxu0 0
        %1028 = vmatprep.subr.bf16.mxu0 0
        %1029 = vmatpush1.bf16.xpose.msra.mxu0 0
        %1030 = vmatprep.subr.bf16.mxu0 0
        %1031 = vmatpush1.bf16.xpose.msra.mxu0 0
        %1032 = vmatprep.subr.bf16.mxu0 0
        %1033 = vmatpush1.bf16.xpose.msra.mxu0 0
        %1034 = vmatprep.subr.bf16.mxu0 0
        %1035 = vmatpush1.bf16.xpose.msra.mxu0 0
        %1036 = vmatprep.mubr.bf16.mxu0 0
        %1037 = vmatmul.mubr.bf16.gmra.mrb[0].mxu0 %v999
        %v1038 = vpop.f32.mrb[0].mxu0
        %v1039 = vadd.f32 0.0, %v1038
        %v1040 = vpop.f32.mrb[0].mxu0
        %v1041 = vpop.f32.mrb[0].mxu0
        %v1042 = vpop.f32.mrb[0].mxu0
        %1043 = vdwg.mxu0
        %1045 = vrot.lane.b32.xlu0 %v943, 96
        %v1046 = vpop.permute.xlu0 %1045
        %v1048 = vsel %vm948, %v943, 0
        %v1051 = vsel %vm948, %v1046, 0
        %1053 = vmatprep.subr.bf16.mxu0 0
        %1054 = vmatpush1.bf16.xpose.msra.mxu0 %v1051
        %1055 = vmatprep.subr.bf16.mxu0 0
        %1056 = vmatpush1.bf16.xpose.msra.mxu0 0
        %1057 = vmatprep.subr.bf16.mxu0 0
        %1058 = vmatpush1.bf16.xpose.msra.mxu0 0
        %1059 = vmatprep.subr.bf16.mxu0 0
        %1060 = vmatpush1.bf16.xpose.msra.mxu0 0
        %1061 = vmatprep.subr.bf16.mxu0 0
        %1062 = vmatpush1.bf16.xpose.msra.mxu0 0
        %1063 = vmatprep.subr.bf16.mxu0 0
        %1064 = vmatpush1.bf16.xpose.msra.mxu0 0
        %1065 = vmatprep.subr.bf16.mxu0 0
        %1066 = vmatpush1.bf16.xpose.msra.mxu0 0
        %1067 = vmatprep.subr.bf16.mxu0 0
        %1068 = vmatpush1.bf16.xpose.msra.mxu0 0
        %1069 = vmatprep.subr.bf16.mxu0 0
        %1070 = vmatpush1.bf16.xpose.msra.mxu0 0
        %1071 = vmatprep.subr.bf16.mxu0 0
        %1072 = vmatpush1.bf16.xpose.msra.mxu0 0
        %1073 = vmatprep.subr.bf16.mxu0 0
        %1074 = vmatpush1.bf16.xpose.msra.mxu0 0
        %1075 = vmatprep.subr.bf16.mxu0 0
        %1076 = vmatpush1.bf16.xpose.msra.mxu0 0
        %1077 = vmatprep.subr.bf16.mxu0 0
        %1078 = vmatpush1.bf16.xpose.msra.mxu0 0
        %1079 = vmatprep.subr.bf16.mxu0 0
        %1080 = vmatpush1.bf16.xpose.msra.mxu0 0
        %1081 = vmatprep.subr.bf16.mxu0 0
        %1082 = vmatpush1.bf16.xpose.msra.mxu0 0
        %1083 = vmatprep.subr.bf16.mxu0 0
        %1084 = vmatpush1.bf16.xpose.msra.mxu0 0
        %1085 = vmatprep.mubr.bf16.mxu0 0
        %1086 = vmatmul.mubr.bf16.gmra.mrb[0].mxu0 %v1048
        %v1087 = vpop.f32.mrb[0].mxu0
        %v1088 = vadd.f32 0.0, %v1087
        %v1089 = vpop.f32.mrb[0].mxu0
        %v1090 = vpop.f32.mrb[0].mxu0
        %v1091 = vpop.f32.mrb[0].mxu0
        %1092 = vdwg.mxu0
        %1094 = vrot.lane.b32.xlu0 %v944, 96
        %v1095 = vpop.permute.xlu0 %1094
        %v1097 = vsel %vm948, %v944, 0
        %v1100 = vsel %vm948, %v1095, 0
        %1102 = vmatprep.subr.bf16.mxu0 0
        %1103 = vmatpush1.bf16.xpose.msra.mxu0 %v1100
        %1104 = vmatprep.subr.bf16.mxu0 0
        %1105 = vmatpush1.bf16.xpose.msra.mxu0 0
        %1106 = vmatprep.subr.bf16.mxu0 0
        %1107 = vmatpush1.bf16.xpose.msra.mxu0 0
        %1108 = vmatprep.subr.bf16.mxu0 0
        %1109 = vmatpush1.bf16.xpose.msra.mxu0 0
        %1110 = vmatprep.subr.bf16.mxu0 0
        %1111 = vmatpush1.bf16.xpose.msra.mxu0 0
        %1112 = vmatprep.subr.bf16.mxu0 0
        %1113 = vmatpush1.bf16.xpose.msra.mxu0 0
        %1114 = vmatprep.subr.bf16.mxu0 0
        %1115 = vmatpush1.bf16.xpose.msra.mxu0 0
        %1116 = vmatprep.subr.bf16.mxu0 0
        %1117 = vmatpush1.bf16.xpose.msra.mxu0 0
        %1118 = vmatprep.subr.bf16.mxu0 0
        %1119 = vmatpush1.bf16.xpose.msra.mxu0 0
        %1120 = vmatprep.subr.bf16.mxu0 0
        %1121 = vmatpush1.bf16.xpose.msra.mxu0 0
        %1122 = vmatprep.subr.bf16.mxu0 0
        %1123 = vmatpush1.bf16.xpose.msra.mxu0 0
        %1124 = vmatprep.subr.bf16.mxu0 0
        %1125 = vmatpush1.bf16.xpose.msra.mxu0 0
        %1126 = vmatprep.subr.bf16.mxu0 0
        %1127 = vmatpush1.bf16.xpose.msra.mxu0 0
        %1128 = vmatprep.subr.bf16.mxu0 0
        %1129 = vmatpush1.bf16.xpose.msra.mxu0 0
        %1130 = vmatprep.subr.bf16.mxu0 0
        %1131 = vmatpush1.bf16.xpose.msra.mxu0 0
        %1132 = vmatprep.subr.bf16.mxu0 0
        %1133 = vmatpush1.bf16.xpose.msra.mxu0 0
        %1134 = vmatprep.mubr.bf16.mxu0 0
        %1135 = vmatmul.mubr.bf16.gmra.mrb[0].mxu0 %v1097
        %v1136 = vpop.f32.mrb[0].mxu0
        %v1137 = vadd.f32 0.0, %v1136
        %v1138 = vpop.f32.mrb[0].mxu0
        %v1139 = vpop.f32.mrb[0].mxu0
        %v1140 = vpop.f32.mrb[0].mxu0
        %1141 = vdwg.mxu0
        %v1142 = vmul.f32 %v990, 0.35355338
        %v1143 = vmul.f32 %v1039, 0.35355338
        %v1144 = vmul.f32 %v1088, 0.35355338
        %v1145 = vmul.f32 %v1137, 0.35355338
        %v1146 = vld [vmem:[%s686] sm:$0x1]
        %v1148 = vlaneseq
        %v1149 = vshrl.u32 %v1148, 7
        %v1150 = vsub.s32 0, %v1149
        %v1151 = vrot.slane %v1146, %v1150
        %v1153 = vadd.f32 %v1142, %v1151
        %v1154 = vadd.f32 %v1143, %v1151
        %v1155 = vadd.f32 %v1144, %v1151
        %v1156 = vadd.f32 %v1145, %v1151
        %v1157 = vsel %vm948, %v1153, -inf
        %1158 = vmax.xlane.f32.xlu0 %v1157
        %v1159 = vpop.xlane.xlu0 %1158
        %v1160 = vsel %vm948, %v1154, -inf
        %1161 = vmax.xlane.f32.xlu0 %v1160
        %v1162 = vpop.xlane.xlu0 %1161
        %v1163 = vsel %vm948, %v1155, -inf
        %1164 = vmax.xlane.f32.xlu0 %v1163
        %v1165 = vpop.xlane.xlu0 %1164
        %v1166 = vsel %vm948, %v1156, -inf
        %1167 = vmax.xlane.f32.xlu0 %v1166
        %v1168 = vpop.xlane.xlu0 %1167
        %v1169 = vsub.f32 %v1153, %v1159
        %v1170 = vsub.f32 %v1154, %v1162
        %v1171 = vsub.f32 %v1155, %v1165
        %v1172 = vsub.f32 %v1156, %v1168
        %v1173 = vmul.f32 %v1169, 1.442695
        %v1174 = vpow.pop %v1173
        %v1175 = vmul.f32 %v1170, 1.442695
        %v1176 = vpow.pop %v1175
        %v1177 = vmul.f32 %v1171, 1.442695
        %v1178 = vpow.pop %v1177
        %v1179 = vmul.f32 %v1172, 1.442695
        %v1180 = vpow.pop %v1179
        %v1181 = vsel %vm948, %v1174, 0.0
        %1182 = vadd.xlane.f32.xlu0 %v1181
        %v1183 = vpop.xlane.xlu0 %1182
        %v1184 = vsel %vm948, %v1176, 0.0
        %1185 = vadd.xlane.f32.xlu0 %v1184
        %v1186 = vpop.xlane.xlu0 %1185
        %v1187 = vsel %vm948, %v1178, 0.0
        %1188 = vadd.xlane.f32.xlu0 %v1187
        %v1189 = vpop.xlane.xlu0 %1188
        %v1190 = vsel %vm948, %v1180, 0.0
        %1191 = vadd.xlane.f32.xlu0 %v1190
        %v1192 = vpop.xlane.xlu0 %1191
        %v1193 = vrcp.pop %v1183
        %v1194 = vrcp.pop %v1186
        %v1195 = vrcp.pop %v1189
        %v1196 = vrcp.pop %v1192
        %v1197 = vmul.f32 %v1174, %v1193
        %v1198 = vmul.f32 %v1176, %v1194
        %v1199 = vmul.f32 %v1178, %v1195
        %v1200 = vmul.f32 %v1180, %v1196
        %v1201 = vpack.c.bf16 %v1197, %v1197
        %v1202 = vpack.c.bf16 %v1198, %v1198
        %v1203 = vpack.c.bf16 %v1199, %v1199
        %v1204 = vpack.c.bf16 %v1200, %v1200
        %1205 = vrot.lane.b32.xlu0 %v941, 64
        %v1206 = vpop.permute.xlu0 %1205
        %v1208 = vsel %vm948, %v1201, 0
        %vm1210 = vcmask 1043456
        %v1212 = vsel %vm1210, %v1206, 0
        %1214 = vmatprep.subr.bf16.mxu0 0
        %1215 = vmatpush1.bf16.msra.mxu0 %v1212
        %1216 = vmatprep.subr.bf16.mxu0 0
        %1217 = vmatpush1.bf16.msra.mxu0 0
        %1218 = vmatprep.subr.bf16.mxu0 0
        %1219 = vmatpush1.bf16.msra.mxu0 0
        %1220 = vmatprep.subr.bf16.mxu0 0
        %1221 = vmatpush1.bf16.msra.mxu0 0
        %1222 = vmatprep.subr.bf16.mxu0 0
        %1223 = vmatpush1.bf16.msra.mxu0 0
        %1224 = vmatprep.subr.bf16.mxu0 0
        %1225 = vmatpush1.bf16.msra.mxu0 0
        %1226 = vmatprep.subr.bf16.mxu0 0
        %1227 = vmatpush1.bf16.msra.mxu0 0
        %1228 = vmatprep.subr.bf16.mxu0 0
        %1229 = vmatpush1.bf16.msra.mxu0 0
        %1230 = vmatprep.subr.bf16.mxu0 0
        %1231 = vmatpush1.bf16.msra.mxu0 0
        %1232 = vmatprep.subr.bf16.mxu0 0
        %1233 = vmatpush1.bf16.msra.mxu0 0
        %1234 = vmatprep.subr.bf16.mxu0 0
        %1235 = vmatpush1.bf16.msra.mxu0 0
        %1236 = vmatprep.subr.bf16.mxu0 0
        %1237 = vmatpush1.bf16.msra.mxu0 0
        %1238 = vmatprep.subr.bf16.mxu0 0
        %1239 = vmatpush1.bf16.msra.mxu0 0
        %1240 = vmatprep.subr.bf16.mxu0 0
        %1241 = vmatpush1.bf16.msra.mxu0 0
        %1242 = vmatprep.subr.bf16.mxu0 0
        %1243 = vmatpush1.bf16.msra.mxu0 0
        %1244 = vmatprep.subr.bf16.mxu0 0
        %1245 = vmatpush1.bf16.msra.mxu0 0
        %1246 = vmatprep.mubr.bf16.mxu0 0
        %1247 = vmatmul.mubr.bf16.gmra.mrb[0].mxu0 %v1208
        %v1248 = vpop.f32.mrb[0].mxu0
        %v1249 = vadd.f32 0.0, %v1248
        %v1250 = vpop.f32.mrb[0].mxu0
        %v1251 = vpop.f32.mrb[0].mxu0
        %v1252 = vpop.f32.mrb[0].mxu0
        %1253 = vdwg.mxu0
        %1254 = vrot.lane.b32.xlu0 %v942, 64
        %v1255 = vpop.permute.xlu0 %1254
        %v1257 = vsel %vm948, %v1202, 0
        %v1260 = vsel %vm1210, %v1255, 0
        %1262 = vmatprep.subr.bf16.mxu0 0
        %1263 = vmatpush1.bf16.msra.mxu0 %v1260
        %1264 = vmatprep.subr.bf16.mxu0 0
        %1265 = vmatpush1.bf16.msra.mxu0 0
        %1266 = vmatprep.subr.bf16.mxu0 0
        %1267 = vmatpush1.bf16.msra.mxu0 0
        %1268 = vmatprep.subr.bf16.mxu0 0
        %1269 = vmatpush1.bf16.msra.mxu0 0
        %1270 = vmatprep.subr.bf16.mxu0 0
        %1271 = vmatpush1.bf16.msra.mxu0 0
        %1272 = vmatprep.subr.bf16.mxu0 0
        %1273 = vmatpush1.bf16.msra.mxu0 0
        %1274 = vmatprep.subr.bf16.mxu0 0
        %1275 = vmatpush1.bf16.msra.mxu0 0
        %1276 = vmatprep.subr.bf16.mxu0 0
        %1277 = vmatpush1.bf16.msra.mxu0 0
        %1278 = vmatprep.subr.bf16.mxu0 0
        %1279 = vmatpush1.bf16.msra.mxu0 0
        %1280 = vmatprep.subr.bf16.mxu0 0
        %1281 = vmatpush1.bf16.msra.mxu0 0
        %1282 = vmatprep.subr.bf16.mxu0 0
        %1283 = vmatpush1.bf16.msra.mxu0 0
        %1284 = vmatprep.subr.bf16.mxu0 0
        %1285 = vmatpush1.bf16.msra.mxu0 0
        %1286 = vmatprep.subr.bf16.mxu0 0
        %1287 = vmatpush1.bf16.msra.mxu0 0
        %1288 = vmatprep.subr.bf16.mxu0 0
        %1289 = vmatpush1.bf16.msra.mxu0 0
        %1290 = vmatprep.subr.bf16.mxu0 0
        %1291 = vmatpush1.bf16.msra.mxu0 0
        %1292 = vmatprep.subr.bf16.mxu0 0
        %1293 = vmatpush1.bf16.msra.mxu0 0
        %1294 = vmatprep.mubr.bf16.mxu0 0
        %1295 = vmatmul.mubr.bf16.gmra.mrb[0].mxu0 %v1257
        %v1296 = vpop.f32.mrb[0].mxu0
        %v1297 = vadd.f32 0.0, %v1296
        %v1298 = vpop.f32.mrb[0].mxu0
        %v1299 = vpop.f32.mrb[0].mxu0
        %v1300 = vpop.f32.mrb[0].mxu0
        %1301 = vdwg.mxu0
        %1302 = vrot.lane.b32.xlu0 %v943, 64
        %v1303 = vpop.permute.xlu0 %1302
        %v1305 = vsel %vm948, %v1203, 0
        %v1308 = vsel %vm1210, %v1303, 0
        %1310 = vmatprep.subr.bf16.mxu0 0
        %1311 = vmatpush1.bf16.msra.mxu0 %v1308
        %1312 = vmatprep.subr.bf16.mxu0 0
        %1313 = vmatpush1.bf16.msra.mxu0 0
        %1314 = vmatprep.subr.bf16.mxu0 0
        %1315 = vmatpush1.bf16.msra.mxu0 0
        %1316 = vmatprep.subr.bf16.mxu0 0
        %1317 = vmatpush1.bf16.msra.mxu0 0
        %1318 = vmatprep.subr.bf16.mxu0 0
        %1319 = vmatpush1.bf16.msra.mxu0 0
        %1320 = vmatprep.subr.bf16.mxu0 0
        %1321 = vmatpush1.bf16.msra.mxu0 0
        %1322 = vmatprep.subr.bf16.mxu0 0
        %1323 = vmatpush1.bf16.msra.mxu0 0
        %1324 = vmatprep.subr.bf16.mxu0 0
        %1325 = vmatpush1.bf16.msra.mxu0 0
        %1326 = vmatprep.subr.bf16.mxu0 0
        %1327 = vmatpush1.bf16.msra.mxu0 0
        %1328 = vmatprep.subr.bf16.mxu0 0
        %1329 = vmatpush1.bf16.msra.mxu0 0
        %1330 = vmatprep.subr.bf16.mxu0 0
        %1331 = vmatpush1.bf16.msra.mxu0 0
        %1332 = vmatprep.subr.bf16.mxu0 0
        %1333 = vmatpush1.bf16.msra.mxu0 0
        %1334 = vmatprep.subr.bf16.mxu0 0
        %1335 = vmatpush1.bf16.msra.mxu0 0
        %1336 = vmatprep.subr.bf16.mxu0 0
        %1337 = vmatpush1.bf16.msra.mxu0 0
        %1338 = vmatprep.subr.bf16.mxu0 0
        %1339 = vmatpush1.bf16.msra.mxu0 0
        %1340 = vmatprep.subr.bf16.mxu0 0
        %1341 = vmatpush1.bf16.msra.mxu0 0
        %1342 = vmatprep.mubr.bf16.mxu0 0
        %1343 = vmatmul.mubr.bf16.gmra.mrb[0].mxu0 %v1305
        %v1344 = vpop.f32.mrb[0].mxu0
        %v1345 = vadd.f32 0.0, %v1344
        %v1346 = vpop.f32.mrb[0].mxu0
        %v1347 = vpop.f32.mrb[0].mxu0
        %v1348 = vpop.f32.mrb[0].mxu0
        %1349 = vdwg.mxu0
        %1350 = vrot.lane.b32.xlu0 %v944, 64
        %v1351 = vpop.permute.xlu0 %1350
        %v1353 = vsel %vm948, %v1204, 0
        %v1356 = vsel %vm1210, %v1351, 0
        %1358 = vmatprep.subr.bf16.mxu0 0
        %1359 = vmatpush1.bf16.msra.mxu0 %v1356
        %1360 = vmatprep.subr.bf16.mxu0 0
        %1361 = vmatpush1.bf16.msra.mxu0 0
        %1362 = vmatprep.subr.bf16.mxu0 0
        %1363 = vmatpush1.bf16.msra.mxu0 0
        %1364 = vmatprep.subr.bf16.mxu0 0
        %1365 = vmatpush1.bf16.msra.mxu0 0
        %1366 = vmatprep.subr.bf16.mxu0 0
        %1367 = vmatpush1.bf16.msra.mxu0 0
        %1368 = vmatprep.subr.bf16.mxu0 0
        %1369 = vmatpush1.bf16.msra.mxu0 0
        %1370 = vmatprep.subr.bf16.mxu0 0
        %1371 = vmatpush1.bf16.msra.mxu0 0
        %1372 = vmatprep.subr.bf16.mxu0 0
        %1373 = vmatpush1.bf16.msra.mxu0 0
        %1374 = vmatprep.subr.bf16.mxu0 0
        %1375 = vmatpush1.bf16.msra.mxu0 0
        %1376 = vmatprep.subr.bf16.mxu0 0
        %1377 = vmatpush1.bf16.msra.mxu0 0
        %1378 = vmatprep.subr.bf16.mxu0 0
        %1379 = vmatpush1.bf16.msra.mxu0 0
        %1380 = vmatprep.subr.bf16.mxu0 0
        %1381 = vmatpush1.bf16.msra.mxu0 0
        %1382 = vmatprep.subr.bf16.mxu0 0
        %1383 = vmatpush1.bf16.msra.mxu0 0
        %1384 = vmatprep.subr.bf16.mxu0 0
        %1385 = vmatpush1.bf16.msra.mxu0 0
        %1386 = vmatprep.subr.bf16.mxu0 0
        %1387 = vmatpush1.bf16.msra.mxu0 0
        %1388 = vmatprep.subr.bf16.mxu0 0
        %1389 = vmatpush1.bf16.msra.mxu0 0
        %1390 = vmatprep.mubr.bf16.mxu0 0
        %1391 = vmatmul.mubr.bf16.gmra.mrb[0].mxu0 %v1353
        %v1392 = vpop.f32.mrb[0].mxu0
        %v1393 = vadd.f32 0.0, %v1392
        %v1394 = vpop.f32.mrb[0].mxu0
        %v1395 = vpop.f32.mrb[0].mxu0
        %v1396 = vpop.f32.mrb[0].mxu0
        %1397 = vdwg.mxu0
        %1399 = vrot.lane.b32.xlu0 %v1297, 8
        %v1400 = vpop.permute.xlu0 %1399
        %1403 = vrot.lane.b32.xlu0 %v1345, 16
        %v1404 = vpop.permute.xlu0 %1403
        %1407 = vrot.lane.b32.xlu0 %v1393, 24
        %v1408 = vpop.permute.xlu0 %1407
        %v1410 = vsel %vm948, %v1249, %v1400
        %vm1411 = vcmask 130048
        %v1412 = vsel %vm1411, %v1410, %v1404
        %vm1413 = vcmask 195584
        %v1414 = vsel %vm1413, %v1412, %v1408
        %v1415 = vpack.c.bf16 %v1414, %v1414
        %v1416 = vld [vmem:[%s813] sm:$0xf]
        %v1417 = vld [vmem:[%s813 + $0x4] sm:$0xf]
        %v1418 = vld [vmem:[%s813 + $0x8] sm:$0xf]
        %v1419 = vld [vmem:[%s813 + $0xc] sm:$0xf]
        %v1420 = vld [vmem:[%s827] sm:$0x1]
        %v1421 = vlaneseq
        %v1422 = vshrl.u32 %v1421, 7
        %v1423 = vsub.s32 0, %v1422
        %v1424 = vrot.slane %v1420, %v1423
        %v1429 = vunpack.c.l.b16 %v1416
        %v1430 = vunpack.c.l.b16 %v1417
        %v1431 = vunpack.c.l.b16 %v1418
        %v1432 = vunpack.c.l.b16 %v1419
        %v1433 = vpack.c.b16 %v1430, %v1429
        %v1434 = vpack.c.b16 %v1432, %v1431
        %v1438 = vsel %vm887, %v1415, 0
        %1440 = vmatprep.subr.bf16.mxu0 0
        %1441 = vmatpush1.bf16.msra.mxu0 %v1433
        %1442 = vmatprep.subr.bf16.mxu0 0
        %1443 = vmatpush1.bf16.msra.mxu0 %v1434
        %1444 = vmatprep.subr.bf16.mxu0 0
        %1445 = vmatpush1.bf16.msra.mxu0 0
        %1446 = vmatprep.subr.bf16.mxu0 0
        %1447 = vmatpush1.bf16.msra.mxu0 0
        %1448 = vmatprep.subr.bf16.mxu0 0
        %1449 = vmatpush1.bf16.msra.mxu0 0
        %1450 = vmatprep.subr.bf16.mxu0 0
        %1451 = vmatpush1.bf16.msra.mxu0 0
        %1452 = vmatprep.subr.bf16.mxu0 0
        %1453 = vmatpush1.bf16.msra.mxu0 0
        %1454 = vmatprep.subr.bf16.mxu0 0
        %1455 = vmatpush1.bf16.msra.mxu0 0
        %1456 = vmatprep.subr.bf16.mxu0 0
        %1457 = vmatpush1.bf16.msra.mxu0 0
        %1458 = vmatprep.subr.bf16.mxu0 0
        %1459 = vmatpush1.bf16.msra.mxu0 0
        %1460 = vmatprep.subr.bf16.mxu0 0
        %1461 = vmatpush1.bf16.msra.mxu0 0
        %1462 = vmatprep.subr.bf16.mxu0 0
        %1463 = vmatpush1.bf16.msra.mxu0 0
        %1464 = vmatprep.subr.bf16.mxu0 0
        %1465 = vmatpush1.bf16.msra.mxu0 0
        %1466 = vmatprep.subr.bf16.mxu0 0
        %1467 = vmatpush1.bf16.msra.mxu0 0
        %1468 = vmatprep.subr.bf16.mxu0 0
        %1469 = vmatpush1.bf16.msra.mxu0 0
        %1470 = vmatprep.subr.bf16.mxu0 0
        %1471 = vmatpush1.bf16.msra.mxu0 0
        %1472 = vmatprep.mubr.bf16.mxu0 0
        %1473 = vmatmul.mubr.bf16.gmra.mrb[0].mxu0 %v1438
        %v1474 = vpop.f32.mrb[0].mxu0
        %v1475 = vadd.f32 %v1424, %v1474
        %v1476 = vpop.f32.mrb[0].mxu0
        %v1477 = vpop.f32.mrb[0].mxu0
        %v1478 = vpop.f32.mrb[0].mxu0
        %1479 = vdwg.mxu0
        %v1480 = vadd.f32 %v1475, %v862
        %v1481 = vld [vmem:[%s827 + $0x1] sm:$0x1]
        %v1482 = vld [vmem:[%s827 + $0x2] sm:$0x1]
        %v1483 = vsel %vm887, %v1480, 0.0
        %1484 = vadd.xlane.f32.xlu0 %v1483
        %v1485 = vpop.xlane.xlu0 %1484
        %v1486 = vrcp.pop 32.0
        %v1487 = vmul.f32 %v1485, %v1486
        %v1488 = vsub.f32 %v1480, %v1487
        %v1489 = vmul.f32 %v1488, %v1488
        %v1490 = vsel %vm887, %v1489, 0.0
        %1491 = vadd.xlane.f32.xlu0 %v1490
        %v1492 = vpop.xlane.xlu0 %1491
        %v1493 = vmul.f32 %v1492, %v1486
        %v1494 = vadd.f32 %v1493, 1e-12
        %v1495 = vrsqrt.pop %v1494
        %v1496 = vmul.f32 %v1488, %v1495
        %v1497 = vlaneseq
        %v1498 = vshrl.u32 %v1497, 7
        %v1499 = vsub.s32 0, %v1498
        %v1500 = vrot.slane %v1481, %v1499
        %v1501 = vmul.f32 %v1496, %v1500
        %v1502 = vlaneseq
        %v1503 = vshrl.u32 %v1502, 7
        %v1504 = vsub.s32 0, %v1503
        %v1505 = vrot.slane %v1482, %v1504
        %v1506 = vadd.f32 %v1501, %v1505
        %v1507 = vpack.c.bf16 %v1506, %v1506
        %v1508 = vld [vmem:[%s818] sm:$0xf]
        %v1509 = vld [vmem:[%s818 + $0x4] sm:$0xf]
        %v1510 = vld [vmem:[%s818 + $0x8] sm:$0xf]
        %v1511 = vld [vmem:[%s818 + $0xc] sm:$0xf]
        %v1512 = vld [vmem:[%s706] sm:$0x1]
        %v1514 = vlaneseq
        %v1515 = vshrl.u32 %v1514, 7
        %v1516 = vsub.s32 0, %v1515
        %v1517 = vrot.slane %v1512, %v1516
        %v1523 = vunpack.c.l.b16 %v1508
        %v1524 = vunpack.c.l.b16 %v1509
        %v1525 = vunpack.c.l.b16 %v1510
        %v1526 = vunpack.c.l.b16 %v1511
        %v1527 = vpack.c.b16 %v1524, %v1523
        %v1528 = vpack.c.b16 %v1526, %v1525
        %v1532 = vsel %vm887, %v1507, 0
        %1534 = vmatprep.subr.bf16.mxu0 0
        %1535 = vmatpush1.bf16.msra.mxu0 %v1527
        %1536 = vmatprep.subr.bf16.mxu0 0
        %1537 = vmatpush1.bf16.msra.mxu0 %v1528
        %1538 = vmatprep.subr.bf16.mxu0 0
        %1539 = vmatpush1.bf16.msra.mxu0 0
        %1540 = vmatprep.subr.bf16.mxu0 0
        %1541 = vmatpush1.bf16.msra.mxu0 0
        %1542 = vmatprep.subr.bf16.mxu0 0
        %1543 = vmatpush1.bf16.msra.mxu0 0
        %1544 = vmatprep.subr.bf16.mxu0 0
        %1545 = vmatpush1.bf16.msra.mxu0 0
        %1546 = vmatprep.subr.bf16.mxu0 0
        %1547 = vmatpush1.bf16.msra.mxu0 0
        %1548 = vmatprep.subr.bf16.mxu0 0
        %1549 = vmatpush1.bf16.msra.mxu0 0
        %1550 = vmatprep.subr.bf16.mxu0 0
        %1551 = vmatpush1.bf16.msra.mxu0 0
        %1552 = vmatprep.subr.bf16.mxu0 0
        %1553 = vmatpush1.bf16.msra.mxu0 0
        %1554 = vmatprep.subr.bf16.mxu0 0
        %1555 = vmatpush1.bf16.msra.mxu0 0
        %1556 = vmatprep.subr.bf16.mxu0 0
        %1557 = vmatpush1.bf16.msra.mxu0 0
        %1558 = vmatprep.subr.bf16.mxu0 0
        %1559 = vmatpush1.bf16.msra.mxu0 0
        %1560 = vmatprep.subr.bf16.mxu0 0
        %1561 = vmatpush1.bf16.msra.mxu0 0
        %1562 = vmatprep.subr.bf16.mxu0 0
        %1563 = vmatpush1.bf16.msra.mxu0 0
        %1564 = vmatprep.subr.bf16.mxu0 0
        %1565 = vmatpush1.bf16.msra.mxu0 0
        %1566 = vmatprep.mubr.bf16.mxu0 0
        %1567 = vmatmul.mubr.bf16.gmra.mrb[0].mxu0 %v1532
        %v1568 = vpop.f32.mrb[0].mxu0
        %v1569 = vadd.f32 %v1517, %v1568
        %v1570 = vpop.f32.mrb[0].mxu0
        %v1571 = vpop.f32.mrb[0].mxu0
        %v1572 = vpop.f32.mrb[0].mxu0
        %1573 = vdwg.mxu0
        %v1574 = vmul.f32 %v1569, 0.5
        %v1575 = vrcp.pop 1.4142135
        %v1576 = vmul.f32 %v1569, %v1575
        %v1577 = verf.f32.pop %v1576
        %v1578 = vadd.f32 %v1577, 1.0
        %v1579 = vmul.f32 %v1574, %v1578
        %v1580 = vpack.c.bf16 %v1579, %v1579
        %v1581 = vld [vmem:[%s823] sm:$0xf]
        %v1582 = vld [vmem:[%s823 + $0x4] sm:$0xf]
        %v1583 = vld [vmem:[%s823 + $0x8] sm:$0xf]
        %v1584 = vld [vmem:[%s823 + $0xc] sm:$0xf]
        %v1585 = vld [vmem:[%s823 + $0x10] sm:$0xf]
        %v1586 = vld [vmem:[%s823 + $0x14] sm:$0xf]
        %v1587 = vld [vmem:[%s823 + $0x18] sm:$0xf]
        %v1588 = vld [vmem:[%s823 + $0x1c] sm:$0xf]
        %v1589 = vld [vmem:[%s827 + $0x3] sm:$0x1]
        %v1590 = vlaneseq
        %v1591 = vshrl.u32 %v1590, 7
        %v1592 = vsub.s32 0, %v1591
        %v1593 = vrot.slane %v1589, %v1592
        %v1602 = vunpack.c.l.b16 %v1581
        %v1603 = vunpack.c.l.b16 %v1582
        %v1604 = vunpack.c.l.b16 %v1583
        %v1605 = vunpack.c.l.b16 %v1584
        %v1606 = vunpack.c.l.b16 %v1585
        %v1607 = vunpack.c.l.b16 %v1586
        %v1608 = vunpack.c.l.b16 %v1587
        %v1609 = vunpack.c.l.b16 %v1588
        %v1610 = vpack.c.b16 %v1603, %v1602
        %v1611 = vpack.c.b16 %v1605, %v1604
        %v1612 = vpack.c.b16 %v1607, %v1606
        %v1613 = vpack.c.b16 %v1609, %v1608
        %vm1618 = vcmask 523264
        %v1620 = vsel %vm1618, %v1580, 0
        %1622 = vmatprep.subr.bf16.mxu0 0
        %1623 = vmatpush1.bf16.msra.mxu0 %v1610
        %1624 = vmatprep.subr.bf16.mxu0 0
        %1625 = vmatpush1.bf16.msra.mxu0 %v1611
        %1626 = vmatprep.subr.bf16.mxu0 0
        %1627 = vmatpush1.bf16.msra.mxu0 %v1612
        %1628 = vmatprep.subr.bf16.mxu0 0
        %1629 = vmatpush1.bf16.msra.mxu0 %v1613
        %1630 = vmatprep.subr.bf16.mxu0 0
        %1631 = vmatpush1.bf16.msra.mxu0 0
        %1632 = vmatprep.subr.bf16.mxu0 0
        %1633 = vmatpush1.bf16.msra.mxu0 0
        %1634 = vmatprep.subr.bf16.mxu0 0
        %1635 = vmatpush1.bf16.msra.mxu0 0
        %1636 = vmatprep.subr.bf16.mxu0 0
        %1637 = vmatpush1.bf16.msra.mxu0 0
        %1638 = vmatprep.subr.bf16.mxu0 0
        %1639 = vmatpush1.bf16.msra.mxu0 0
        %1640 = vmatprep.subr.bf16.mxu0 0
        %1641 = vmatpush1.bf16.msra.mxu0 0
        %1642 = vmatprep.subr.bf16.mxu0 0
        %1643 = vmatpush1.bf16.msra.mxu0 0
        %1644 = vmatprep.subr.bf16.mxu0 0
        %1645 = vmatpush1.bf16.msra.mxu0 0
        %1646 = vmatprep.subr.bf16.mxu0 0
        %1647 = vmatpush1.bf16.msra.mxu0 0
        %1648 = vmatprep.subr.bf16.mxu0 0
        %1649 = vmatpush1.bf16.msra.mxu0 0
        %1650 = vmatprep.subr.bf16.mxu0 0
        %1651 = vmatpush1.bf16.msra.mxu0 0
        %1652 = vmatprep.subr.bf16.mxu0 0
        %1653 = vmatpush1.bf16.msra.mxu0 0
        %1654 = vmatprep.mubr.bf16.mxu0 0
        %1655 = vmatmul.mubr.bf16.gmra.mrb[0].mxu0 %v1620
        %v1656 = vpop.f32.mrb[0].mxu0
        %v1657 = vadd.f32 %v1593, %v1656
        %v1658 = vpop.f32.mrb[0].mxu0
        %v1659 = vpop.f32.mrb[0].mxu0
        %v1660 = vpop.f32.mrb[0].mxu0
        %1661 = vdwg.mxu0
        %v1662 = vadd.f32 %v1657, %v1506
        %v1663 = vld [vmem:[%s827 + $0x4] sm:$0x1]
        %v1664 = vld [vmem:[%s827 + $0x5] sm:$0x1]
        %v1665 = vsel %vm887, %v1662, 0.0
        %1666 = vadd.xlane.f32.xlu0 %v1665
        %v1667 = vpop.xlane.xlu0 %1666
        %v1668 = vmul.f32 %v1667, %v1486
        %v1669 = vsub.f32 %v1662, %v1668
        %v1670 = vmul.f32 %v1669, %v1669
        %v1671 = vsel %vm887, %v1670, 0.0
        %1672 = vadd.xlane.f32.xlu0 %v1671
        %v1673 = vpop.xlane.xlu0 %1672
        %v1674 = vmul.f32 %v1673, %v1486
        %v1675 = vadd.f32 %v1674, 1e-12
        %v1676 = vrsqrt.pop %v1675
        %v1677 = vmul.f32 %v1669, %v1676
        %v1678 = vlaneseq
        %v1679 = vshrl.u32 %v1678, 7
        %v1680 = vsub.s32 0, %v1679
        %v1681 = vrot.slane %v1663, %v1680
        %v1682 = vmul.f32 %v1677, %v1681
        %v1683 = vlaneseq
        %v1684 = vshrl.u32 %v1683, 7
        %v1685 = vsub.s32 0, %v1684
        %v1686 = vrot.slane %v1664, %v1685
        %v1687 = vadd.f32 %v1682, %v1686
        %1688 = vst.msk [vmem:[#allocation2] sm:$0xff] %vm887, %v1687
        %p1689 = scmp.eq.s32.totalorder %s50, 1
        // Predicated region
        $region109: #{tpu_custom_call.1} parent=83 // pred_check
          %p1690 = pneg %p1689
        $region110: #{tpu_custom_call.1} parent=83 // pred_check_branch
          %1692 = sbr.rel (%p1690) target = $region112
        $region111: #{tpu_custom_call.1} parent=83 // pred_region
          %1693 = vst.msk [vmem:[%s790] sm:$0xff] %vm887, %v1687
          %v1694 = vpack.c.bf16 %v1687, %v1687
          %v1695 = vld [vmem:[%s10] sm:$0xf]
          %v1696 = vld [vmem:[%s10 + $0x4] sm:$0xf]
          %v1697 = vld [vmem:[%s10 + $0x8] sm:$0xf]
          %v1698 = vld [vmem:[%s10 + $0xc] sm:$0xf]
          %v1699 = vld [vmem:[%s11] sm:$0x1]
          %v1704 = vunpack.c.l.b16 %v1695
          %v1705 = vunpack.c.l.b16 %v1696
          %v1706 = vunpack.c.l.b16 %v1697
          %v1707 = vunpack.c.l.b16 %v1698
          %v1708 = vpack.c.b16 %v1705, %v1704
          %v1709 = vpack.c.b16 %v1707, %v1706
          %v1713 = vsel %vm887, %v1694, 0
          %1715 = vmatprep.subr.bf16.mxu0 0
          %1716 = vmatpush1.bf16.msra.mxu0 %v1708
          %1717 = vmatprep.subr.bf16.mxu0 0
          %1718 = vmatpush1.bf16.msra.mxu0 %v1709
          %1719 = vmatprep.subr.bf16.mxu0 0
          %1720 = vmatpush1.bf16.msra.mxu0 0
          %1721 = vmatprep.subr.bf16.mxu0 0
          %1722 = vmatpush1.bf16.msra.mxu0 0
          %1723 = vmatprep.subr.bf16.mxu0 0
          %1724 = vmatpush1.bf16.msra.mxu0 0
          %1725 = vmatprep.subr.bf16.mxu0 0
          %1726 = vmatpush1.bf16.msra.mxu0 0
          %1727 = vmatprep.subr.bf16.mxu0 0
          %1728 = vmatpush1.bf16.msra.mxu0 0
          %1729 = vmatprep.subr.bf16.mxu0 0
          %1730 = vmatpush1.bf16.msra.mxu0 0
          %1731 = vmatprep.subr.bf16.mxu0 0
          %1732 = vmatpush1.bf16.msra.mxu0 0
          %1733 = vmatprep.subr.bf16.mxu0 0
          %1734 = vmatpush1.bf16.msra.mxu0 0
          %1735 = vmatprep.subr.bf16.mxu0 0
          %1736 = vmatpush1.bf16.msra.mxu0 0
          %1737 = vmatprep.subr.bf16.mxu0 0
          %1738 = vmatpush1.bf16.msra.mxu0 0
          %1739 = vmatprep.subr.bf16.mxu0 0
          %1740 = vmatpush1.bf16.msra.mxu0 0
          %1741 = vmatprep.subr.bf16.mxu0 0
          %1742 = vmatpush1.bf16.msra.mxu0 0
          %1743 = vmatprep.subr.bf16.mxu0 0
          %1744 = vmatpush1.bf16.msra.mxu0 0
          %1745 = vmatprep.subr.bf16.mxu0 0
          %1746 = vmatpush1.bf16.msra.mxu0 0
          %1747 = vmatprep.mubr.bf16.mxu0 0
          %1748 = vmatmul.mubr.bf16.gmra.mrb[0].mxu0 %v1713
          %v1749 = vpop.f32.mrb[0].mxu0
          %v1750 = vadd.f32 %v1699, %v1749
          %v1751 = vpop.f32.mrb[0].mxu0
          %v1752 = vpop.f32.mrb[0].mxu0
          %v1753 = vpop.f32.mrb[0].mxu0
          %1754 = vdwg.mxu0
          %v1755 = vtanh.pop %v1750
          %v1756 = vld [vmem:[%s14] sm:$0xff]
          %v1757 = vld [vmem:[%s14 + $0x8] sm:$0xff]
          %v1758 = vld [vmem:[%s14 + $0x10] sm:$0xff]
          %v1759 = vld [vmem:[%s14 + $0x18] sm:$0xff]
          %v1760 = vld [vmem:[%s15] sm:$0x1]
          %v1762 = vsel %vm887, %v1755, 0
          %1764 = vmatprep.subr.mxu0 0.0
          %1765 = vmatpush1.msra.mxu0 %v1756
          %1766 = vmatprep.subr.mxu0 0.0
          %1767 = vmatpush1.msra.mxu0 %v1757
          %1768 = vmatprep.subr.mxu0 0.0
          %1769 = vmatpush1.msra.mxu0 %v1758
          %1770 = vmatprep.subr.mxu0 0.0
          %1771 = vmatpush1.msra.mxu0 %v1759
          %1772 = vmatprep.subr.mxu0 0.0
          %1773 = vmatpush1.msra.mxu0 0.0
          %1774 = vmatprep.subr.mxu0 0.0
          %1775 = vmatpush1.msra.mxu0 0.0
          %1776 = vmatprep.subr.mxu0 0.0
          %1777 = vmatpush1.msra.mxu0 0.0
          %1778 = vmatprep.subr.mxu0 0.0
          %1779 = vmatpush1.msra.mxu0 0.0
          %1780 = vmatprep.subr.mxu0 0.0
          %1781 = vmatpush1.msra.mxu0 0.0
          %1782 = vmatprep.subr.mxu0 0.0
          %1783 = vmatpush1.msra.mxu0 0.0
          %1784 = vmatprep.subr.mxu0 0.0
          %1785 = vmatpush1.msra.mxu0 0.0
          %1786 = vmatprep.subr.mxu0 0.0
          %1787 = vmatpush1.msra.mxu0 0.0
          %1788 = vmatprep.subr.mxu0 0.0
          %1789 = vmatpush1.msra.mxu0 0.0
          %1790 = vmatprep.subr.mxu0 0.0
          %1791 = vmatpush1.msra.mxu0 0.0
          %1792 = vmatprep.subr.mxu0 0.0
          %1793 = vmatpush1.msra.mxu0 0.0
          %1794 = vmatprep.subr.mxu0 0.0
          %1795 = vmatpush1.msra.mxu0 0.0
          %1796 = vmatprep.subr.mxu0 0.0
          %1797 = vmatpush1.msra.mxu0 0.0
          %1798 = vmatprep.subr.mxu0 0.0
          %1799 = vmatpush1.msra.mxu0 0.0
          %1800 = vmatprep.subr.mxu0 0.0
          %1801 = vmatpush1.msra.mxu0 0.0
          %1802 = vmatprep.subr.mxu0 0.0
          %1803 = vmatpush1.msra.mxu0 0.0
          %1804 = vmatprep.subr.mxu0 0.0
          %1805 = vmatpush1.msra.mxu0 0.0
          %1806 = vmatprep.subr.mxu0 0.0
          %1807 = vmatpush1.msra.mxu0 0.0
          %1808 = vmatprep.subr.mxu0 0.0
          %1809 = vmatpush1.msra.mxu0 0.0
          %1810 = vmatprep.subr.mxu0 0.0
          %1811 = vmatpush1.msra.mxu0 0.0
          %1812 = vmatprep.subr.mxu0 0.0
          %1813 = vmatpush1.msra.mxu0 0.0
          %1814 = vmatprep.subr.mxu0 0.0
          %1815 = vmatpush1.msra.mxu0 0.0
          %1816 = vmatprep.subr.mxu0 0.0
          %1817 = vmatpush1.msra.mxu0 0.0
          %1818 = vmatprep.subr.mxu0 0.0
          %1819 = vmatpush1.msra.mxu0 0.0
          %1820 = vmatprep.subr.mxu0 0.0
          %1821 = vmatpush1.msra.mxu0 0.0
          %1822 = vmatprep.subr.mxu0 0.0
          %1823 = vmatpush1.msra.mxu0 0.0
          %1824 = vmatprep.subr.mxu0 0.0
          %1825 = vmatpush1.msra.mxu0 0.0
          %1826 = vmatprep.subr.mxu0 0.0
          %1827 = vmatpush1.msra.mxu0 0.0
          %1828 = vmatprep.mubr.f32.mxu0 0.0
          %1829 = vmatmul.mubr.f32.gmra.mrb[0].mxu0 %v1762
          %v1830 = vpop.f32.mrb[0].mxu0
          %v1831 = vadd.f32 %v1760, %v1830
          %v1832 = vpop.f32.mrb[0].mxu0
          %1833 = vdwg.mxu0
          %1835 = vrot.lane.b32.xlu0 %v1831, 32
          %v1836 = vpop.permute.xlu0 %1835
          %v1838 = vsel %vm887, %v1755, %v1836
          %vm1839 = vcmask 277504
          %v1840 = vsel %vm1839, %v1838, 0.0
          %1841 = vst [vmem:[%s803] sm:$0x1] %v1840
          %s1842 = scalar_lea.vmem %s10, 16
          %v1843 = vld [vmem:[%s1842] sm:$0xf]
          %v1844 = vld [vmem:[%s1842 + $0x4] sm:$0xf]
          %v1845 = vld [vmem:[%s1842 + $0x8] sm:$0xf]
          %v1846 = vld [vmem:[%s1842 + $0xc] sm:$0xf]
          %v1847 = vld [vmem:[%s11 + $0x1] sm:$0x1]
          %v1848 = vlaneseq
          %v1849 = vshrl.u32 %v1848, 7
          %v1850 = vsub.s32 0, %v1849
          %v1851 = vrot.slane %v1847, %v1850
          %v1856 = vunpack.c.l.b16 %v1843
          %v1857 = vunpack.c.l.b16 %v1844
          %v1858 = vunpack.c.l.b16 %v1845
          %v1859 = vunpack.c.l.b16 %v1846
          %v1860 = vpack.c.b16 %v1857, %v1856
          %v1861 = vpack.c.b16 %v1859, %v1858
          %1864 = vmatprep.subr.bf16.mxu0 0
          %1865 = vmatpush1.bf16.msra.mxu0 %v1860
          %1866 = vmatprep.subr.bf16.mxu0 0
          %1867 = vmatpush1.bf16.msra.mxu0 %v1861
          %1868 = vmatprep.subr.bf16.mxu0 0
          %1869 = vmatpush1.bf16.msra.mxu0 0
          %1870 = vmatprep.subr.bf16.mxu0 0
          %1871 = vmatpush1.bf16.msra.mxu0 0
          %1872 = vmatprep.subr.bf16.mxu0 0
          %1873 = vmatpush1.bf16.msra.mxu0 0
          %1874 = vmatprep.subr.bf16.mxu0 0
          %1875 = vmatpush1.bf16.msra.mxu0 0
          %1876 = vmatprep.subr.bf16.mxu0 0
          %1877 = vmatpush1.bf16.msra.mxu0 0
          %1878 = vmatprep.subr.bf16.mxu0 0
          %1879 = vmatpush1.bf16.msra.mxu0 0
          %1880 = vmatprep.subr.bf16.mxu0 0
          %1881 = vmatpush1.bf16.msra.mxu0 0
          %1882 = vmatprep.subr.bf16.mxu0 0
          %1883 = vmatpush1.bf16.msra.mxu0 0
          %1884 = vmatprep.subr.bf16.mxu0 0
          %1885 = vmatpush1.bf16.msra.mxu0 0
          %1886 = vmatprep.subr.bf16.mxu0 0
          %1887 = vmatpush1.bf16.msra.mxu0 0
          %1888 = vmatprep.subr.bf16.mxu0 0
          %1889 = vmatpush1.bf16.msra.mxu0 0
          %1890 = vmatprep.subr.bf16.mxu0 0
          %1891 = vmatpush1.bf16.msra.mxu0 0
          %1892 = vmatprep.subr.bf16.mxu0 0
          %1893 = vmatpush1.bf16.msra.mxu0 0
          %1894 = vmatprep.subr.bf16.mxu0 0
          %1895 = vmatpush1.bf16.msra.mxu0 0
          %1896 = vmatprep.mubr.bf16.mxu0 0
          %1897 = vmatmul.mubr.bf16.gmra.mrb[0].mxu0 %v1713
          %v1898 = vpop.f32.mrb[0].mxu0
          %v1899 = vadd.f32 %v1851, %v1898
          %v1900 = vpop.f32.mrb[0].mxu0
          %v1901 = vpop.f32.mrb[0].mxu0
          %v1902 = vpop.f32.mrb[0].mxu0
          %1903 = vdwg.mxu0
          %v1904 = vmul.f32 %v1899, 0.5
          %v1905 = vmul.f32 %v1899, %v1575
          %v1906 = verf.f32.pop %v1905
          %v1907 = vadd.f32 %v1906, 1.0
          %v1908 = vmul.f32 %v1904, %v1907
          %v1909 = vld [vmem:[%s11 + $0x2] sm:$0x1]
          %v1910 = vld [vmem:[%s11 + $0x3] sm:$0x1]
          %v1911 = vsel %vm887, %v1908, 0.0
          %1912 = vadd.xlane.f32.xlu0 %v1911
          %v1913 = vpop.xlane.xlu0 %1912
          %v1914 = vmul.f32 %v1913, %v1486
          %v1915 = vsub.f32 %v1908, %v1914
          %v1916 = vmul.f32 %v1915, %v1915
          %v1917 = vsel %vm887, %v1916, 0.0
          %1918 = vadd.xlane.f32.xlu0 %v1917
          %v1919 = vpop.xlane.xlu0 %1918
          %v1920 = vmul.f32 %v1919, %v1486
          %v1921 = vadd.f32 %v1920, 1e-12
          %v1922 = vrsqrt.pop %v1921
          %v1923 = vmul.f32 %v1915, %v1922
          %v1924 = vlaneseq
          %v1925 = vshrl.u32 %v1924, 7
          %v1926 = vsub.s32 0, %v1925
          %v1927 = vrot.slane %v1909, %v1926
          %v1928 = vmul.f32 %v1923, %v1927
          %v1929 = vlaneseq
          %v1930 = vshrl.u32 %v1929, 7
          %v1931 = vsub.s32 0, %v1930
          %v1932 = vrot.slane %v1910, %v1931
          %v1933 = vadd.f32 %v1928, %v1932
          %v1934 = vpack.c.bf16 %v1933, %v1933
          %v1935 = vld [vmem:[%s12] sm:$0xf]
          %v1936 = vld [vmem:[%s12 + $0x4] sm:$0xf]
          %v1937 = vld [vmem:[%s12 + $0x8] sm:$0xf]
          %v1938 = vld [vmem:[%s12 + $0xc] sm:$0xf]
          %v1939 = vld [vmem:[%s13] sm:$0x1]
          %v1941 = vlaneseq
          %v1942 = vshrl.u32 %v1941, 7
          %v1943 = vsub.s32 0, %v1942
          %v1944 = vrot.slane %v1939, %v1943
          %v1950 = vunpack.c.l.b16 %v1935
          %v1951 = vunpack.c.l.b16 %v1936
          %v1952 = vunpack.c.l.b16 %v1937
          %v1953 = vunpack.c.l.b16 %v1938
          %v1954 = vpack.c.b16 %v1951, %v1950
          %v1955 = vpack.c.b16 %v1953, %v1952
          %v1959 = vsel %vm887, %v1934, 0
          %1961 = vmatprep.subr.bf16.mxu0 0
          %1962 = vmatpush1.bf16.msra.mxu0 %v1954
          %1963 = vmatprep.subr.bf16.mxu0 0
          %1964 = vmatpush1.bf16.msra.mxu0 %v1955
          %1965 = vmatprep.subr.bf16.mxu0 0
          %1966 = vmatpush1.bf16.msra.mxu0 0
          %1967 = vmatprep.subr.bf16.mxu0 0
          %1968 = vmatpush1.bf16.msra.mxu0 0
          %1969 = vmatprep.subr.bf16.mxu0 0
          %1970 = vmatpush1.bf16.msra.mxu0 0
          %1971 = vmatprep.subr.bf16.mxu0 0
          %1972 = vmatpush1.bf16.msra.mxu0 0
          %1973 = vmatprep.subr.bf16.mxu0 0
          %1974 = vmatpush1.bf16.msra.mxu0 0
          %1975 = vmatprep.subr.bf16.mxu0 0
          %1976 = vmatpush1.bf16.msra.mxu0 0
          %1977 = vmatprep.subr.bf16.mxu0 0
          %1978 = vmatpush1.bf16.msra.mxu0 0
          %1979 = vmatprep.subr.bf16.mxu0 0
          %1980 = vmatpush1.bf16.msra.mxu0 0
          %1981 = vmatprep.subr.bf16.mxu0 0
          %1982 = vmatpush1.bf16.msra.mxu0 0
          %1983 = vmatprep.subr.bf16.mxu0 0
          %1984 = vmatpush1.bf16.msra.mxu0 0
          %1985 = vmatprep.subr.bf16.mxu0 0
          %1986 = vmatpush1.bf16.msra.mxu0 0
          %1987 = vmatprep.subr.bf16.mxu0 0
          %1988 = vmatpush1.bf16.msra.mxu0 0
          %1989 = vmatprep.subr.bf16.mxu0 0
          %1990 = vmatpush1.bf16.msra.mxu0 0
          %1991 = vmatprep.subr.bf16.mxu0 0
          %1992 = vmatpush1.bf16.msra.mxu0 0
          %1993 = vmatprep.mubr.bf16.mxu0 0
          %1994 = vmatmul.mubr.bf16.gmra.mrb[0].mxu0 %v1959
          %v1995 = vpop.f32.mrb[0].mxu0
          %v1996 = vadd.f32 %v1944, %v1995
          %v1997 = vpop.f32.mrb[0].mxu0
          %v1998 = vpop.f32.mrb[0].mxu0
          %v1999 = vpop.f32.mrb[0].mxu0
          %2000 = vdwg.mxu0
          %2001 = vst [vmem:[%s797] sm:$0xff] %v1996
        $region112: #{tpu_custom_call.1} parent=83 // pred_fallthru
          _
        %s2002 = sand.u32 %s446, 1
        %s2003 = scalar_lea.sflag [#allocation5], %s2002
        %s2004 = sand.u32 %s446, 1
        %s2005 = smul.addr %s2004, 8
        %s2006 = scalar_lea.vmem [#allocation12], %s2005
        %s2007 = sand.u32 %s45, 1
        %s2008 = scalar_lea.sflag [#allocation14], %s2007
        %s2009 = sand.u32 %s472, 1
        %s2010 = smul.addr %s2009, 8
        %s2011 = scalar_lea.vmem [#allocation13], %s2010
        %s2012 = sand.u32 %s45, 1
        %s2013 = scalar_lea.sflag [#allocation14], %s2012
        %s2014 = sand.u32 %s498, 1
        %s2015 = scalar_lea.vmem [#allocation15], %s2014
        // Predicated region
        $region113: #{tpu_custom_call.1} parent=83 // pred_check
          %p2016 = pneg %p456
        $region114: #{tpu_custom_call.1} parent=83 // pred_check_branch
          %2018 = sbr.rel (%p2016) target = $region116
        $region115: #{tpu_custom_call.1} parent=83 // pred_region
          %s2020 = ssub.s32 128, 128
          %2021 = vsyncadd %s2003, %s2020
          %s2022 = smul.addr %s49, 128
          %s2023 = scalar_lea.hbm %s16, %s2022
          %s2025 = sshll.u32 %s2006, 4
          %s2026 = int_to_ptr.vmem [resolvable:$true] %s2025
          %2028 = dma.vmem_to_hbm [thread:$0]  %s2026, 128, %s2023, %s2003
        $region116: #{tpu_custom_call.1} parent=83 // pred_fallthru
          _
        // Predicated region
        $region117: #{tpu_custom_call.1} parent=83 // pred_check
          %p2029 = pneg %p482
        $region118: #{tpu_custom_call.1} parent=83 // pred_check_branch
          %2031 = sbr.rel (%p2029) target = $region120
        $region119: #{tpu_custom_call.1} parent=83 // pred_region
          %s2033 = ssub.s32 128, 128
          %2034 = vsyncadd %s2008, %s2033
          %s2035 = smul.addr %s49, 128
          %s2036 = scalar_lea.hbm %s17, %s2035
          %s2038 = sshll.u32 %s2011, 4
          %s2039 = int_to_ptr.vmem [resolvable:$true] %s2038
          %2041 = dma.vmem_to_hbm [thread:$0]  %s2039, 128, %s2036, %s2008
        $region120: #{tpu_custom_call.1} parent=83 // pred_fallthru
          _
        // Predicated region
        $region121: #{tpu_custom_call.1} parent=83 // pred_check
          %p2042 = pneg %p508
        $region122: #{tpu_custom_call.1} parent=83 // pred_check_branch
          %2044 = sbr.rel (%p2042) target = $region124
        $region123: #{tpu_custom_call.1} parent=83 // pred_region
          %s2046 = ssub.s32 16, 16
          %2047 = vsyncadd %s2013, %s2046
          %s2048 = smul.addr %s49, 16
          %s2049 = scalar_lea.hbm %s18, %s2048
          %s2051 = sshll.u32 %s2015, 4
          %s2052 = int_to_ptr.vmem [resolvable:$true] %s2051
          %2054 = dma.vmem_to_hbm [thread:$0]  %s2052, 16, %s2049, %s2013
        $region124: #{tpu_custom_call.1} parent=83 // pred_fallthru
          _
      $region84: #{tpu_custom_call.1} parent=5 // pred_fallthru
        _
      %p2055 = scmp.le.s32.totalorder 2, %s40
      // Predicated region
      $region125: #{tpu_custom_call.1} parent=5 // pred_check
        %p2056 = pneg %p2055
      $region126: #{tpu_custom_call.1} parent=5 // pred_check_branch
        %2058 = sbr.rel (%p2056) target = $region128
      $region127: #{tpu_custom_call.1} parent=5 // pred_region
        %s2059 = ssub.s32 %s40, 2
        // Predicated region
        $region129: #{tpu_custom_call.1} parent=127 // pred_check
          %p2060 = pneg %p462
        $region130: #{tpu_custom_call.1} parent=127 // pred_check_branch
          %2062 = sbr.rel (%p2060) target = $region132
        $region131: #{tpu_custom_call.1} parent=127 // pred_region
          %s2063 = sand.u32 %s447, 1
          %s2064 = scalar_lea.sflag [#allocation5], %s2063
          %s2065 = sand.u32 %s447, 1
          %s2066 = smul.addr %s2065, 8
          %s2067 = scalar_lea.vmem [#allocation12], %s2066
          %2068 = dma.done %s2064, 128
        $region132: #{tpu_custom_call.1} parent=127 // pred_fallthru
          _
        // Predicated region
        $region133: #{tpu_custom_call.1} parent=127 // pred_check
          %p2069 = pneg %p488
        $region134: #{tpu_custom_call.1} parent=127 // pred_check_branch
          %2071 = sbr.rel (%p2069) target = $region136
        $region135: #{tpu_custom_call.1} parent=127 // pred_region
          %s2072 = sand.u32 %s46, 1
          %s2073 = scalar_lea.sflag [#allocation14], %s2072
          %s2074 = sand.u32 %s473, 1
          %s2075 = smul.addr %s2074, 8
          %s2076 = scalar_lea.vmem [#allocation13], %s2075
          %2077 = dma.done %s2073, 128
        $region136: #{tpu_custom_call.1} parent=127 // pred_fallthru
          _
        // Predicated region
        $region137: #{tpu_custom_call.1} parent=127 // pred_check
          %p2078 = pneg %p514
        $region138: #{tpu_custom_call.1} parent=127 // pred_check_branch
          %2080 = sbr.rel (%p2078) target = $region140
        $region139: #{tpu_custom_call.1} parent=127 // pred_region
          %s2081 = sand.u32 %s46, 1
          %s2082 = scalar_lea.sflag [#allocation14], %s2081
          %s2083 = sand.u32 %s499, 1
          %s2084 = scalar_lea.vmem [#allocation15], %s2083
          %2085 = dma.done %s2082, 16
        $region140: #{tpu_custom_call.1} parent=127 // pred_fallthru
          _
      $region128: #{tpu_custom_call.1} parent=5 // pred_fallthru
        _
    $region6: #{tpu_custom_call.1} parent=1 // loop_footer
      %s44 = sadd.s32 1, %s40
    $region7: #{tpu_custom_call.1} parent=1 // loop_footer_branch
      %39 = sbr.rel target = $region3
    $region8: #{tpu_custom_call.1} parent=1 // loop_exit
      _
    %2086 = vsyncpa [#allocation4], 1
    %s2087 = scalar_lea.sflag [#allocation4], 1
    %2088 = vsyncpa %s2087, 1
    %2089 = vsyncpa [#allocation7], 1
    %s2090 = scalar_lea.sflag [#allocation7], 1
    %2091 = vsyncpa %s2090, 1
    %2092 = vsyncpa [#allocation10], 1
    %s2093 = scalar_lea.sflag [#allocation10], 1
    %2094 = vsyncpa %s2093, 1
    %2095 = vsyncpa [#allocation5], 1
    %s2096 = scalar_lea.sflag [#allocation5], 1
    %2097 = vsyncpa %s2096, 1
    %2098 = vsyncpa [#allocation14], 1
    %s2099 = scalar_lea.sflag [#allocation14], 1
    %2100 = vsyncpa %s2099, 1

</llo_original>
